<compile_context>
chip_gen: v7x
topology: tpu7x:2x2x1
jax: 0.10.0
libtpu: 0.0.40
codegen_flags: <defaults>
</compile_context>

<pallas_src>
import functools
import math

import jax
import jax.numpy as jnp
from jax.experimental import pallas as pl
from jax.experimental.pallas import tpu as pltpu


# ----------------------------------------------------------------------------
# Pallas kernels
# ----------------------------------------------------------------------------
def _linear_kernel(x_ref, w_ref, b_ref, o_ref):
    # x: (TM, Din) f32, w: (Din, Dout) bf16 (pre-transposed), b: (1, Dout) f32
    x = x_ref[...].astype(jnp.bfloat16)
    acc = jnp.dot(x, w_ref[...], preferred_element_type=jnp.float32)
    o_ref[...] = acc + b_ref[...]


def _attn_core(q, k, v, scale, mask=None):
    # q: (TQ, H, dk) f32, k/v: (Sk, H, dk) f32, mask: (TQ, Sk) f32 or None
    qb = q.astype(jnp.bfloat16)
    kb = k.astype(jnp.bfloat16)
    vb = v.astype(jnp.bfloat16)
    # NT contraction over dk, batched over heads -> (H, TQ, Sk)
    scores = jnp.einsum("qhd,khd->hqk", qb, kb,
                        preferred_element_type=jnp.float32) * scale
    if mask is not None:
        scores = jnp.where(mask[None, :, :] == 0, jnp.float32(-1e9), scores)
    # numerically-stable softmax over keys (same result as F.softmax)
    scores = scores - jnp.max(scores, axis=-1, keepdims=True)
    p = jnp.exp(scores)
    p = p * pl.reciprocal(jnp.sum(p, axis=-1, keepdims=True), approx=True)
    # (H, TQ, Sk) x (Sk, H, dk) -> (TQ, H, dk)
    ctx = jnp.einsum("hqk,khd->qhd", p.astype(jnp.bfloat16), vb,
                     preferred_element_type=jnp.float32)
    return ctx


def _attn_proj_kernel_nomask(q_ref, k_ref, v_ref, wo_ref, bo_ref, o_ref, *,
                             scale):
    # q: (1, TQ, H, dk), k/v: (1, Sk, H, dk), wo: (D, D) bf16, bo: (1, D) f32
    # o: (1, TQ, D)  — attention + output projection fused.
    ctx = _attn_core(q_ref[0], k_ref[0], v_ref[0], scale)
    tq, h, dk = ctx.shape
    ctx2 = ctx.reshape(tq, h * dk).astype(jnp.bfloat16)   # lane-dense merge
    o_ref[0] = (jnp.dot(ctx2, wo_ref[...], preferred_element_type=jnp.float32)
                + bo_ref[...])


def _attn_proj_kernel_mask(m_ref, q_ref, k_ref, v_ref, wo_ref, bo_ref, o_ref,
                           *, scale):
    # m: (1, TQ, Sk) shared across heads (== mask.unsqueeze(1) in the reference)
    ctx = _attn_core(q_ref[0], k_ref[0], v_ref[0], scale, mask=m_ref[0])
    tq, h, dk = ctx.shape
    ctx2 = ctx.reshape(tq, h * dk).astype(jnp.bfloat16)
    o_ref[0] = (jnp.dot(ctx2, wo_ref[...], preferred_element_type=jnp.float32)
                + bo_ref[...])


# ----------------------------------------------------------------------------
# Wrappers around pallas_call
# ----------------------------------------------------------------------------
def pallas_linear(x2d, wt_bf16, b2, *, tm=512):
    """y = x2d @ W^T + b  with W pre-transposed/pre-cast:  wt_bf16 = W.T (bf16).

    x2d: (M, Din) f32, wt_bf16: (Din, Dout) bf16, b2: (1, Dout) f32
    """
    M, Din = x2d.shape
    Dout = wt_bf16.shape[1]
    TM = min(tm, M)
    grid = (pl.cdiv(M, TM),)
    return pl.pallas_call(
        _linear_kernel,
        out_shape=jax.ShapeDtypeStruct((M, Dout), jnp.float32),
        grid=grid,
        in_specs=[
            pl.BlockSpec((TM, Din), lambda i: (i, 0)),
            pl.BlockSpec((Din, Dout), lambda i: (0, 0)),
            pl.BlockSpec((1, Dout), lambda i: (0, 0)),
        ],
        out_specs=pl.BlockSpec((TM, Dout), lambda i: (i, 0)),
        compiler_params=pltpu.CompilerParams(
            dimension_semantics=("parallel",)),
    )(x2d, wt_bf16, b2)


def pallas_attention_proj(q4, k4, v4, wo_t, bo2, mask3=None, *, tq=256):
    """Scaled dot-product attention (all heads) fused with output projection.

    q4: (B, Sq, H, dk), k4/v4: (B, Sk, H, dk), wo_t: (D, D) bf16,
    bo2: (1, D) f32, mask3: (1 or B, Sq, Sk) f32 or None.
    Returns (B, Sq, D) = softmax(QK^T/sqrt(dk)) V  merged over heads, then
    projected by W_o and biased.
    """
    B, Sq, H, dk = q4.shape
    Sk = k4.shape[1]
    D = H * dk
    TQ = min(tq, Sq)
    grid = (B, pl.cdiv(Sq, TQ))
    scale = 1.0 / math.sqrt(dk)

    qkv_specs = [
        pl.BlockSpec((1, TQ, H, dk), lambda b, i: (b, i, 0, 0)),
        pl.BlockSpec((1, Sk, H, dk), lambda b, i: (b, 0, 0, 0)),
        pl.BlockSpec((1, Sk, H, dk), lambda b, i: (b, 0, 0, 0)),
    ]
    proj_specs = [
        pl.BlockSpec((D, D), lambda b, i: (0, 0)),
        pl.BlockSpec((1, D), lambda b, i: (0, 0)),
    ]

    if mask3 is None:
        kernel = functools.partial(_attn_proj_kernel_nomask, scale=scale)
        in_specs = qkv_specs + proj_specs
        args = (q4, k4, v4, wo_t, bo2)
    else:
        mb = mask3.shape[0]
        # batch-1 mask is reused for every batch via the index_map (no HBM
        # broadcast copies).
        if mb > 1:
            mask_map = lambda b, i: (b, i, 0)
        else:
            mask_map = lambda b, i: (0, i, 0)
        kernel = functools.partial(_attn_proj_kernel_mask, scale=scale)
        in_specs = [pl.BlockSpec((1, TQ, Sk), mask_map)] + qkv_specs + proj_specs
        args = (mask3, q4, k4, v4, wo_t, bo2)

    return pl.pallas_call(
        kernel,
        out_shape=jax.ShapeDtypeStruct((B, Sq, D), jnp.float32),
        grid=grid,
        in_specs=in_specs,
        out_specs=pl.BlockSpec((1, TQ, D), lambda b, i: (b, i, 0)),
        compiler_params=pltpu.CompilerParams(
            dimension_semantics=("parallel", "parallel")),
    )(*args)


def multi_head_attention(query, key, value, params, head_num, mask=None):
    """Forward pass equivalent to MultiHeadAttention.forward (eval mode)."""
    B, Sq, D = query.shape
    Sk = key.shape[1]
    Sv = value.shape[1]
    d_k = D // head_num
    (wq_t, bq), (wk_t, bk), (wv_t, bv), (wo_t, bo) = params

    # Q/K/V projections (tiled bf16 Pallas matmul kernels).
    # NOTE: query/key/value are distinct tensors in this module, so the
    # projections cannot share a single fused activation read.
    q = pallas_linear(query.reshape(B * Sq, D), wq_t, bq).reshape(B, Sq, head_num, d_k)
    k = pallas_linear(key.reshape(B * Sk, D), wk_t, bk).reshape(B, Sk, head_num, d_k)
    v = pallas_linear(value.reshape(B * Sv, D), wv_t, bv).reshape(B, Sv, head_num, d_k)

    # mask.unsqueeze(1) in the reference => shared across heads.
    mask3 = None
    if mask is not None:
        m = mask.astype(jnp.float32)
        if m.ndim == 2:
            m = m[None]
        mask3 = jnp.broadcast_to(m, (m.shape[0], Sq, Sk))

    # Attention keeps the (B, S, H, dk) layout (no host transposes), merges the
    # heads lane-dense in-register and applies the output projection in the
    # same kernel, so the "transpose + contiguous + view + Linear" tail of the
    # reference needs no extra HBM round-trip.
    out = pallas_attention_proj(q, k, v, wo_t, bo, mask3)   # (B, Sq, D)
    return out


mha_jit = jax.jit(multi_head_attention, static_argnames=("head_num",))


# ----------------------------------------------------------------------------
# Deterministic parameter init (mimics nn.Linear uniform init shapes)
# ----------------------------------------------------------------------------
def init_params(key, d_model):
    bound = 1.0 / math.sqrt(d_model)
    params = []
    for _ in range(4):
        kw, kb, key = jax.random.split(key, 3)
        w = jax.random.uniform(kw, (d_model, d_model), jnp.float32, -bound, bound)
        b = jax.random.uniform(kb, (d_model,), jnp.float32, -bound, bound)
        params.append((w, b))
    return params


def prepare_params(raw_params):
    """One-time weight prep: transpose to (Din, Dout) and cast to bf16."""
    prepped = []
    for w, b in raw_params:
        wt = jnp.asarray(w, jnp.float32).T.astype(jnp.bfloat16)   # (Din, Dout)
        b2 = jnp.asarray(b, jnp.float32).reshape(1, -1)           # (1, Dout)
        prepped.append((wt, b2))
    return prepped


if __name__ == "__main__":
    B, S, D, H = 2, 8, 32, 4   # batch, seq, d_model, heads  (d_k = 8)

    root = jax.random.PRNGKey(0)
    kq, kk, kv, kp = jax.random.split(root, 4)
    query = jax.random.normal(kq, (B, S, D), jnp.float32)
    key_in = jax.random.normal(kk, (B, S, D), jnp.float32)
    value = jax.random.normal(kv, (B, S, D), jnp.float32)
    params = prepare_params(init_params(kp, D))

    # mask=None path (specialized kernel: no mask DMA / select)
    out = mha_jit(query, key_in, value, params, head_num=H)
    out = jax.block_until_ready(out)
    assert out.shape == (B, S, D)
    assert bool(jnp.all(jnp.isfinite(out)))

    # masked path (causal mask, broadcast across heads like mask.unsqueeze(1))
    causal = jnp.tril(jnp.ones((S, S), jnp.float32))[None]        # (1, S, S)
    out_m = mha_jit(query, key_in, value, params, head_num=H, mask=causal)
    out_m = jax.block_until_ready(out_m)
    assert out_m.shape == (B, S, D)
    assert bool(jnp.all(jnp.isfinite(out_m)))

    print("KERNEL_OK")
</pallas_src>

<mosaic_0001>
module attributes {stable_mosaic.version = 11 : i64} {
  func.func @_attn_proj_kernel_nomask(%arg0: i32, %arg1: i32, %arg2: memref<1x8x4x8xf32, #tpu.memory_space<vmem>>, %arg3: memref<1x8x4x8xf32, #tpu.memory_space<vmem>>, %arg4: memref<1x8x4x8xf32, #tpu.memory_space<vmem>>, %arg5: memref<32x32xbf16, #tpu.memory_space<vmem>>, %arg6: memref<1x32xf32, #tpu.memory_space<vmem>>, %arg7: memref<1x8x32xf32, #tpu.memory_space<vmem>>) attributes {dimension_semantics = [#tpu.dimension_semantics<parallel>, #tpu.dimension_semantics<parallel>], iteration_bounds = array<i64: 2, 1>, scalar_prefetch = 0 : i64, scratch_operands = 0 : i64, tpu.core_type = #tpu.core_type<tc>, window_params = [{transform_indices = @transform_0, window_bounds = array<i64: 1, 8, 4, 8>}, {transform_indices = @transform_1, window_bounds = array<i64: 1, 8, 4, 8>}, {transform_indices = @transform_2, window_bounds = array<i64: 1, 8, 4, 8>}, {pipeline_mode = #tpu.pipeline_mode<synchronous>, transform_indices = @transform_3, window_bounds = array<i64: 32, 32>}, {pipeline_mode = #tpu.pipeline_mode<synchronous>, transform_indices = @transform_4, window_bounds = array<i64: 1, 32>}, {transform_indices = @transform_5, window_bounds = array<i64: 1, 8, 32>}]} {
    %c0 = arith.constant 0 : index
    %c0_0 = arith.constant 0 : index
    %c0_1 = arith.constant 0 : index
    %c0_2 = arith.constant 0 : index
    %0 = vector.load %arg2[%c0, %c0_0, %c0_1, %c0_2] : memref<1x8x4x8xf32, #tpu.memory_space<vmem>>, vector<1x8x4x8xf32>
    %1 = vector.shape_cast %0 : vector<1x8x4x8xf32> to vector<8x4x8xf32>
    %c0_3 = arith.constant 0 : index
    %c0_4 = arith.constant 0 : index
    %c0_5 = arith.constant 0 : index
    %c0_6 = arith.constant 0 : index
    %2 = vector.load %arg3[%c0_3, %c0_4, %c0_5, %c0_6] : memref<1x8x4x8xf32, #tpu.memory_space<vmem>>, vector<1x8x4x8xf32>
    %3 = vector.shape_cast %2 : vector<1x8x4x8xf32> to vector<8x4x8xf32>
    %c0_7 = arith.constant 0 : index
    %c0_8 = arith.constant 0 : index
    %c0_9 = arith.constant 0 : index
    %c0_10 = arith.constant 0 : index
    %4 = vector.load %arg4[%c0_7, %c0_8, %c0_9, %c0_10] : memref<1x8x4x8xf32, #tpu.memory_space<vmem>>, vector<1x8x4x8xf32>
    %5 = vector.shape_cast %4 : vector<1x8x4x8xf32> to vector<8x4x8xf32>
    %6 = arith.truncf %1 : vector<8x4x8xf32> to vector<8x4x8xbf16>
    %7 = arith.truncf %3 : vector<8x4x8xf32> to vector<8x4x8xbf16>
    %8 = arith.truncf %5 : vector<8x4x8xf32> to vector<8x4x8xbf16>
    "tpu.trace_start"() <{level = 10 : i32, message = "qhd,khd->hqk"}> : () -> ()
    %cst = arith.constant dense<0.000000e+00> : vector<4x8x8xf32>
    %9 = tpu.matmul %6, %7, %cst {dimension_numbers = #tpu.dot_dimension_numbers<[2], [2], [0], [0], [0, 1, 0, 0, 1, 0], [1], [1]>} : vector<8x4x8xbf16>, vector<8x4x8xbf16>, vector<4x8x8xf32> -> vector<4x8x8xf32>
    "tpu.trace_stop"() : () -> ()
    %cst_11 = arith.constant 0.353553385 : f32
    %10 = vector.broadcast %cst_11 : f32 to vector<4x8x8xf32>
    %11 = arith.mulf %9, %10 : vector<4x8x8xf32>
    %cst_12 = arith.constant dense<0xFF800000> : vector<4x8xf32>
    %12 = vector.multi_reduction <maximumf>, %11, %cst_12 [2] : vector<4x8x8xf32> to vector<4x8xf32>
    %13 = vector.shape_cast %12 : vector<4x8xf32> to vector<4x8x1xf32>
    %14 = vector.broadcast %13 : vector<4x8x1xf32> to vector<4x8x8xf32>
    %15 = arith.subf %11, %14 : vector<4x8x8xf32>
    %16 = math.exp %15 : vector<4x8x8xf32>
    %cst_13 = arith.constant dense<0.000000e+00> : vector<4x8xf32>
    %17 = vector.multi_reduction <add>, %16, %cst_13 [2] : vector<4x8x8xf32> to vector<4x8xf32>
    %18 = vector.shape_cast %17 : vector<4x8xf32> to vector<4x8x1xf32>
    %19 = tpu.reciprocal %18 {approx = true} : vector<4x8x1xf32> -> vector<4x8x1xf32>
    %20 = vector.broadcast %19 : vector<4x8x1xf32> to vector<4x8x8xf32>
    %21 = arith.mulf %16, %20 : vector<4x8x8xf32>
    %22 = arith.truncf %21 : vector<4x8x8xf32> to vector<4x8x8xbf16>
    "tpu.trace_start"() <{level = 10 : i32, message = "hqk,khd->qhd"}> : () -> ()
    %cst_14 = arith.constant dense<0.000000e+00> : vector<4x8x8xf32>
    %23 = tpu.matmul %8, %22, %cst_14 {dimension_numbers = #tpu.dot_dimension_numbers<[0], [2], [2], [1], [0, 1, 0, 2, 1, 1], [1], [0]>} : vector<8x4x8xbf16>, vector<4x8x8xbf16>, vector<4x8x8xf32> -> vector<4x8x8xf32>
    %24 = tpu.transpose %23, [2, 0, 1] : vector<4x8x8xf32> -> vector<8x4x8xf32>
    "tpu.trace_stop"() : () -> ()
    %25 = vector.shape_cast %24 : vector<8x4x8xf32> to vector<8x32xf32>
    %26 = arith.truncf %25 : vector<8x32xf32> to vector<8x32xbf16>
    %c0_15 = arith.constant 0 : index
    %c0_16 = arith.constant 0 : index
    %27 = vector.load %arg5[%c0_15, %c0_16] : memref<32x32xbf16, #tpu.memory_space<vmem>>, vector<32x32xbf16>
    %cst_17 = arith.constant dense<0.000000e+00> : vector<8x32xf32>
    %28 = tpu.matmul %26, %27, %cst_17 {dimension_numbers = #tpu.dot_dimension_numbers<[1], [0], [0], [1], [0, 0, 1, 1], [], []>} : vector<8x32xbf16>, vector<32x32xbf16>, vector<8x32xf32> -> vector<8x32xf32>
    %c0_18 = arith.constant 0 : index
    %c0_19 = arith.constant 0 : index
    %29 = vector.load %arg6[%c0_18, %c0_19] : memref<1x32xf32, #tpu.memory_space<vmem>>, vector<1x32xf32>
    %30 = vector.broadcast %29 : vector<1x32xf32> to vector<8x32xf32>
    %31 = arith.addf %28, %30 : vector<8x32xf32>
    %c0_20 = arith.constant 0 : index
    %c0_21 = arith.constant 0 : index
    %c0_22 = arith.constant 0 : index
    %32 = vector.load %arg7[%c0_20, %c0_21, %c0_22] : memref<1x8x32xf32, #tpu.memory_space<vmem>>, vector<1x8x32xf32>
    %33 = vector.shape_cast %32 : vector<1x8x32xf32> to vector<8x32xf32>
    %34 = vector.shape_cast %31 : vector<8x32xf32> to vector<1x8x32xf32>
    tpu.vector_store %arg7[%c0_20, %c0_21, %c0_22], %34 {strides = array<i32>} : memref<1x8x32xf32, #tpu.memory_space<vmem>>, vector<1x8x32xf32>,
    return
  }
  func.func @transform_0(%arg0: i32, %arg1: i32) -> (i32, i32, i32, i32) {
    %c0_i32 = arith.constant 0 : i32
    %c0_i32_0 = arith.constant 0 : i32
    %c0_i32_1 = arith.constant 0 : i32
    return %arg0, %arg1, %c0_i32, %c0_i32_0 : i32, i32, i32, i32
  }
  func.func @transform_1(%arg0: i32, %arg1: i32) -> (i32, i32, i32, i32) {
    %c0_i32 = arith.constant 0 : i32
    %c0_i32_0 = arith.constant 0 : i32
    %c0_i32_1 = arith.constant 0 : i32
    %c0_i32_2 = arith.constant 0 : i32
    return %arg0, %c0_i32, %c0_i32_0, %c0_i32_1 : i32, i32, i32, i32
  }
  func.func @transform_2(%arg0: i32, %arg1: i32) -> (i32, i32, i32, i32) {
    %c0_i32 = arith.constant 0 : i32
    %c0_i32_0 = arith.constant 0 : i32
    %c0_i32_1 = arith.constant 0 : i32
    %c0_i32_2 = arith.constant 0 : i32
    return %arg0, %c0_i32, %c0_i32_0, %c0_i32_1 : i32, i32, i32, i32
  }
  func.func @transform_3(%arg0: i32, %arg1: i32) -> (i32, i32) {
    %c0_i32 = arith.constant 0 : i32
    %c0_i32_0 = arith.constant 0 : i32
    %c0_i32_1 = arith.constant 0 : i32
    return %c0_i32, %c0_i32_0 : i32, i32
  }
  func.func @transform_4(%arg0: i32, %arg1: i32) -> (i32, i32) {
    %c0_i32 = arith.constant 0 : i32
    %c0_i32_0 = arith.constant 0 : i32
    %c0_i32_1 = arith.constant 0 : i32
    return %c0_i32, %c0_i32_0 : i32, i32
  }
  func.func @transform_5(%arg0: i32, %arg1: i32) -> (i32, i32, i32) {
    %c0_i32 = arith.constant 0 : i32
    %c0_i32_0 = arith.constant 0 : i32
    return %arg0, %arg1, %c0_i32 : i32, i32, i32
  }
}

module attributes {stable_mosaic.version = 11 : i64} {
  func.func @_linear_kernel(%arg0: i32, %arg1: memref<16x32xf32, #tpu.memory_space<vmem>>, %arg2: memref<32x32xbf16, #tpu.memory_space<vmem>>, %arg3: memref<1x32xf32, #tpu.memory_space<vmem>>, %arg4: memref<16x32xf32, #tpu.memory_space<vmem>>) attributes {dimension_semantics = [#tpu.dimension_semantics<parallel>], iteration_bounds = array<i64: 1>, scalar_prefetch = 0 : i64, scratch_operands = 0 : i64, tpu.core_type = #tpu.core_type<tc>, window_params = [{transform_indices = @transform_0, window_bounds = array<i64: 16, 32>}, {pipeline_mode = #tpu.pipeline_mode<synchronous>, transform_indices = @transform_1, window_bounds = array<i64: 32, 32>}, {pipeline_mode = #tpu.pipeline_mode<synchronous>, transform_indices = @transform_2, window_bounds = array<i64: 1, 32>}, {transform_indices = @transform_3, window_bounds = array<i64: 16, 32>}]} {
    %c0 = arith.constant 0 : index
    %c0_0 = arith.constant 0 : index
    %0 = vector.load %arg1[%c0, %c0_0] : memref<16x32xf32, #tpu.memory_space<vmem>>, vector<16x32xf32>
    %1 = arith.truncf %0 : vector<16x32xf32> to vector<16x32xbf16>
    %c0_1 = arith.constant 0 : index
    %c0_2 = arith.constant 0 : index
    %2 = vector.load %arg2[%c0_1, %c0_2] : memref<32x32xbf16, #tpu.memory_space<vmem>>, vector<32x32xbf16>
    %cst = arith.constant dense<0.000000e+00> : vector<16x32xf32>
    %3 = tpu.matmul %1, %2, %cst {dimension_numbers = #tpu.dot_dimension_numbers<[1], [0], [0], [1], [0, 0, 1, 1], [], []>} : vector<16x32xbf16>, vector<32x32xbf16>, vector<16x32xf32> -> vector<16x32xf32>
    %c0_3 = arith.constant 0 : index
    %c0_4 = arith.constant 0 : index
    %4 = vector.load %arg3[%c0_3, %c0_4] : memref<1x32xf32, #tpu.memory_space<vmem>>, vector<1x32xf32>
    %5 = vector.broadcast %4 : vector<1x32xf32> to vector<16x32xf32>
    %6 = arith.addf %3, %5 : vector<16x32xf32>
    %c0_5 = arith.constant 0 : index
    %c0_6 = arith.constant 0 : index
    %7 = vector.load %arg4[%c0_5, %c0_6] : memref<16x32xf32, #tpu.memory_space<vmem>>, vector<16x32xf32>
    tpu.vector_store %arg4[%c0_5, %c0_6], %6 {strides = array<i32>} : memref<16x32xf32, #tpu.memory_space<vmem>>, vector<16x32xf32>,
    return
  }
  func.func @transform_0(%arg0: i32) -> (i32, i32) {
    %c0_i32 = arith.constant 0 : i32
    %c0_i32_0 = arith.constant 0 : i32
    return %arg0, %c0_i32 : i32, i32
  }
  func.func @transform_1(%arg0: i32) -> (i32, i32) {
    %c0_i32 = arith.constant 0 : i32
    %c0_i32_0 = arith.constant 0 : i32
    %c0_i32_1 = arith.constant 0 : i32
    return %c0_i32, %c0_i32_0 : i32, i32
  }
  func.func @transform_2(%arg0: i32) -> (i32, i32) {
    %c0_i32 = arith.constant 0 : i32
    %c0_i32_0 = arith.constant 0 : i32
    %c0_i32_1 = arith.constant 0 : i32
    return %c0_i32, %c0_i32_0 : i32, i32
  }
  func.func @transform_3(%arg0: i32) -> (i32, i32) {
    %c0_i32 = arith.constant 0 : i32
    %c0_i32_0 = arith.constant 0 : i32
    return %arg0, %c0_i32 : i32, i32
  }
}

module attributes {stable_mosaic.version = 11 : i64} {
  func.func @_linear_kernel(%arg0: i32, %arg1: memref<16x32xf32, #tpu.memory_space<vmem>>, %arg2: memref<32x32xbf16, #tpu.memory_space<vmem>>, %arg3: memref<1x32xf32, #tpu.memory_space<vmem>>, %arg4: memref<16x32xf32, #tpu.memory_space<vmem>>) attributes {dimension_semantics = [#tpu.dimension_semantics<parallel>], iteration_bounds = array<i64: 1>, scalar_prefetch = 0 : i64, scratch_operands = 0 : i64, tpu.core_type = #tpu.core_type<tc>, window_params = [{transform_indices = @transform_0, window_bounds = array<i64: 16, 32>}, {pipeline_mode = #tpu.pipeline_mode<synchronous>, transform_indices = @transform_1, window_bounds = array<i64: 32, 32>}, {pipeline_mode = #tpu.pipeline_mode<synchronous>, transform_indices = @transform_2, window_bounds = array<i64: 1, 32>}, {transform_indices = @transform_3, window_bounds = array<i64: 16, 32>}]} {
    %c0 = arith.constant 0 : index
    %c0_0 = arith.constant 0 : index
    %0 = vector.load %arg1[%c0, %c0_0] : memref<16x32xf32, #tpu.memory_space<vmem>>, vector<16x32xf32>
    %1 = arith.truncf %0 : vector<16x32xf32> to vector<16x32xbf16>
    %c0_1 = arith.constant 0 : index
    %c0_2 = arith.constant 0 : index
    %2 = vector.load %arg2[%c0_1, %c0_2] : memref<32x32xbf16, #tpu.memory_space<vmem>>, vector<32x32xbf16>
    %cst = arith.constant dense<0.000000e+00> : vector<16x32xf32>
    %3 = tpu.matmul %1, %2, %cst {dimension_numbers = #tpu.dot_dimension_numbers<[1], [0], [0], [1], [0, 0, 1, 1], [], []>} : vector<16x32xbf16>, vector<32x32xbf16>, vector<16x32xf32> -> vector<16x32xf32>
    %c0_3 = arith.constant 0 : index
    %c0_4 = arith.constant 0 : index
    %4 = vector.load %arg3[%c0_3, %c0_4] : memref<1x32xf32, #tpu.memory_space<vmem>>, vector<1x32xf32>
    %5 = vector.broadcast %4 : vector<1x32xf32> to vector<16x32xf32>
    %6 = arith.addf %3, %5 : vector<16x32xf32>
    %c0_5 = arith.constant 0 : index
    %c0_6 = arith.constant 0 : index
    %7 = vector.load %arg4[%c0_5, %c0_6] : memref<16x32xf32, #tpu.memory_space<vmem>>, vector<16x32xf32>
    tpu.vector_store %arg4[%c0_5, %c0_6], %6 {strides = array<i32>} : memref<16x32xf32, #tpu.memory_space<vmem>>, vector<16x32xf32>,
    return
  }
  func.func @transform_0(%arg0: i32) -> (i32, i32) {
    %c0_i32 = arith.constant 0 : i32
    %c0_i32_0 = arith.constant 0 : i32
    return %arg0, %c0_i32 : i32, i32
  }
  func.func @transform_1(%arg0: i32) -> (i32, i32) {
    %c0_i32 = arith.constant 0 : i32
    %c0_i32_0 = arith.constant 0 : i32
    %c0_i32_1 = arith.constant 0 : i32
    return %c0_i32, %c0_i32_0 : i32, i32
  }
  func.func @transform_2(%arg0: i32) -> (i32, i32) {
    %c0_i32 = arith.constant 0 : i32
    %c0_i32_0 = arith.constant 0 : i32
    %c0_i32_1 = arith.constant 0 : i32
    return %c0_i32, %c0_i32_0 : i32, i32
  }
  func.func @transform_3(%arg0: i32) -> (i32, i32) {
    %c0_i32 = arith.constant 0 : i32
    %c0_i32_0 = arith.constant 0 : i32
    return %arg0, %c0_i32 : i32, i32
  }
}

</mosaic_0001>

<llo_original>
// kernel: multi_head_attention.4
$region0: #{multi_head_attention.4}
  #allocation0 [shape = 'u32[]', space=smem, size = 0x4, offset = 0x4, fixed_abs, tag = 'smem constant byte address 0x4 - core index']
  #allocation1 [shape = 'u32[144,128]{1,0:T(1,128)}', space=vmem, size = 0x12000, scoped, tag = 'internal scratch']
  %s0 = inlined_call_operand.hbm [shape: f32[16,32], index: 0, kind: input, shape index: {}]
  %s1 = inlined_call_operand.vmem [shape: bf16[32,32], index: 1, kind: input, shape index: {}]
  %s2 = inlined_call_operand.vmem [shape: f32[1,32], index: 2, kind: input, shape index: {}]
  %s3 = inlined_call_operand.vmem [shape: f32[16,32], index: 3, kind: output, shape index: {}]
  %s4 = sld [smem:[#allocation0]]
  $region26: #{multi_head_attention.4} parent=0
    _
  %s6 = ssub.s32 1, %s4
  %s7 = scalar_select 0, %s6, %s4
  $region1: #{multi_head_attention.4} parent=0
    #allocation2 [shape = 'u8[8192]{0}', space=vmem, size = 0x2000, scoped, tag = 'input window, operand 0, single buffered']
    #allocation3 [shape = 's32[1]{0}', space=sflag, size = 0x4, scoped, tag = 'scoped memory for multi_head_attention.4']
    %8 = vsyncpa [#allocation3], 0
    // Predicated region
    $region2: #{multi_head_attention.4} parent=1 // pred_check
      _
    $region3: #{multi_head_attention.4} parent=1 // pred_check_branch
      %10 = sbr.rel (0) target = $region5
    $region4: #{multi_head_attention.4} parent=1 // pred_region
      %s12 = ssub.s32 256, 256
      %13 = vsyncadd [#allocation3], %s12
      %s14 = sshll.u32 [#allocation2], 4
      %s15 = int_to_ptr.vmem [resolvable:$true] %s14
      %20 = dma.hbm_to_vmem [thread:$0]  %s0, 256, %s15, [#allocation3], 128, 128, 8
    $region5: #{multi_head_attention.4} parent=1 // pred_fallthru
      _
    // Predicated region
    $region6: #{multi_head_attention.4} parent=1 // pred_check
      _
    $region7: #{multi_head_attention.4} parent=1 // pred_check_branch
      %22 = sbr.rel (0) target = $region9
    $region8: #{multi_head_attention.4} parent=1 // pred_region
      _
    $region9: #{multi_head_attention.4} parent=1 // pred_fallthru
      _
    // Predicated region
    $region10: #{multi_head_attention.4} parent=1 // pred_check
      _
    $region11: #{multi_head_attention.4} parent=1 // pred_check_branch
      %24 = sbr.rel (0) target = $region13
    $region12: #{multi_head_attention.4} parent=1 // pred_region
      _
    $region13: #{multi_head_attention.4} parent=1 // pred_fallthru
      _
    // Predicated region
    $region14: #{multi_head_attention.4} parent=1 // pred_check
      _
    $region15: #{multi_head_attention.4} parent=1 // pred_check_branch
      %26 = sbr.rel (0) target = $region17
    $region16: #{multi_head_attention.4} parent=1 // pred_region
      %27 = dma.done [#allocation3], 256
    $region17: #{multi_head_attention.4} parent=1 // pred_fallthru
      _
    %v29 = vld [vmem:[#allocation2] sm:$0xff]
    %v30 = vld [vmem:[#allocation2 + $0x8] sm:$0xff]
    %v31 = vpack.c.bf16 %v30, %v29
    %v32 = vld [vmem:[%s1] sm:$0xf]
    %v33 = vld [vmem:[%s1 + $0x4] sm:$0xf]
    %v34 = vld [vmem:[%s1 + $0x8] sm:$0xf]
    %v35 = vld [vmem:[%s1 + $0xc] sm:$0xf]
    %v36 = vld [vmem:[%s2] sm:$0x1]
    %v38 = vlaneseq
    %v39 = vshrl.u32 %v38, 7
    %v40 = vsub.s32 0, %v39
    %v41 = vrot.slane %v36, %v40
    %v47 = vunpack.c.l.b16 %v32
    %v48 = vunpack.c.l.b16 %v33
    %v49 = vunpack.c.l.b16 %v34
    %v50 = vunpack.c.l.b16 %v35
    %v51 = vpack.c.b16 %v48, %v47
    %v52 = vpack.c.b16 %v50, %v49
    %vm55 = vcmask 261120
    %v57 = vsel %vm55, %v31, 0
    %59 = vmatprep.subr.bf16.mxu0 0
    %60 = vmatpush1.bf16.msra.mxu0 %v51
    %61 = vmatprep.subr.bf16.mxu0 0
    %62 = vmatpush1.bf16.msra.mxu0 %v52
    %63 = vmatprep.subr.bf16.mxu0 0
    %64 = vmatpush1.bf16.msra.mxu0 0
    %65 = vmatprep.subr.bf16.mxu0 0
    %66 = vmatpush1.bf16.msra.mxu0 0
    %67 = vmatprep.subr.bf16.mxu0 0
    %68 = vmatpush1.bf16.msra.mxu0 0
    %69 = vmatprep.subr.bf16.mxu0 0
    %70 = vmatpush1.bf16.msra.mxu0 0
    %71 = vmatprep.subr.bf16.mxu0 0
    %72 = vmatpush1.bf16.msra.mxu0 0
    %73 = vmatprep.subr.bf16.mxu0 0
    %74 = vmatpush1.bf16.msra.mxu0 0
    %75 = vmatprep.subr.bf16.mxu0 0
    %76 = vmatpush1.bf16.msra.mxu0 0
    %77 = vmatprep.subr.bf16.mxu0 0
    %78 = vmatpush1.bf16.msra.mxu0 0
    %79 = vmatprep.subr.bf16.mxu0 0
    %80 = vmatpush1.bf16.msra.mxu0 0
    %81 = vmatprep.subr.bf16.mxu0 0
    %82 = vmatpush1.bf16.msra.mxu0 0
    %83 = vmatprep.subr.bf16.mxu0 0
    %84 = vmatpush1.bf16.msra.mxu0 0
    %85 = vmatprep.subr.bf16.mxu0 0
    %86 = vmatpush1.bf16.msra.mxu0 0
    %87 = vmatprep.subr.bf16.mxu0 0
    %88 = vmatpush1.bf16.msra.mxu0 0
    %89 = vmatprep.subr.bf16.mxu0 0
    %90 = vmatpush1.bf16.msra.mxu0 0
    %91 = vmatprep.mubr.bf16.mxu0 0
    %92 = vmatmul.mubr.bf16.gmra.mrb[0].mxu0 %v57
    %v93 = vpop.f32.mrb[0].mxu0
    %v94 = vadd.f32 %v41, %v93
    %v95 = vpop.f32.mrb[0].mxu0
    %v96 = vpop.f32.mrb[0].mxu0
    %v97 = vadd.f32 %v41, %v96
    %v98 = vpop.f32.mrb[0].mxu0
    %99 = vdwg.mxu0
    %100 = vst.msk [vmem:[%s3] sm:$0xff] %vm55, %v94
    %101 = vst.msk [vmem:[%s3 + $0x8] sm:$0xff] %vm55, %v97
    // Predicated region
    $region18: #{multi_head_attention.4} parent=1 // pred_check
      _
    $region19: #{multi_head_attention.4} parent=1 // pred_check_branch
      %103 = sbr.rel (0) target = $region21
    $region20: #{multi_head_attention.4} parent=1 // pred_region
      _
    $region21: #{multi_head_attention.4} parent=1 // pred_fallthru
      _
    // Predicated region
    $region22: #{multi_head_attention.4} parent=1 // pred_check
      _
    $region23: #{multi_head_attention.4} parent=1 // pred_check_branch
      %105 = sbr.rel (0) target = $region25
    $region24: #{multi_head_attention.4} parent=1 // pred_region
      _
    $region25: #{multi_head_attention.4} parent=1 // pred_fallthru
      _
    %106 = vsyncpa [#allocation3], 1

// kernel: multi_head_attention.5
$region0: #{multi_head_attention.5}
  #allocation0 [shape = 'u32[]', space=smem, size = 0x4, offset = 0x4, fixed_abs, tag = 'smem constant byte address 0x4 - core index']
  #allocation1 [shape = 'u32[144,128]{1,0:T(1,128)}', space=vmem, size = 0x12000, scoped, tag = 'internal scratch']
  %s0 = inlined_call_operand.vmem [shape: f32[16,32], index: 0, kind: input, shape index: {}]
  %s1 = inlined_call_operand.vmem [shape: bf16[32,32], index: 1, kind: input, shape index: {}]
  %s2 = inlined_call_operand.vmem [shape: f32[1,32], index: 2, kind: input, shape index: {}]
  %s3 = inlined_call_operand.vmem [shape: f32[16,32], index: 3, kind: output, shape index: {}]
  %s4 = sld [smem:[#allocation0]]
  $region22: #{multi_head_attention.5} parent=0
    _
  %s6 = ssub.s32 1, %s4
  %s7 = scalar_select 0, %s6, %s4
  // Predicated region
  $region2: #{multi_head_attention.5} parent=0 // pred_check
    _
  $region3: #{multi_head_attention.5} parent=0 // pred_check_branch
    %9 = sbr.rel (0) target = $region5
  $region4: #{multi_head_attention.5} parent=0 // pred_region
    _
  $region5: #{multi_head_attention.5} parent=0 // pred_fallthru
    _
  // Predicated region
  $region6: #{multi_head_attention.5} parent=0 // pred_check
    _
  $region7: #{multi_head_attention.5} parent=0 // pred_check_branch
    %11 = sbr.rel (0) target = $region9
  $region8: #{multi_head_attention.5} parent=0 // pred_region
    _
  $region9: #{multi_head_attention.5} parent=0 // pred_fallthru
    _
  // Predicated region
  $region10: #{multi_head_attention.5} parent=0 // pred_check
    _
  $region11: #{multi_head_attention.5} parent=0 // pred_check_branch
    %13 = sbr.rel (0) target = $region13
  $region12: #{multi_head_attention.5} parent=0 // pred_region
    _
  $region13: #{multi_head_attention.5} parent=0 // pred_fallthru
    _
  %v15 = vld [vmem:[%s0] sm:$0xff]
  %v16 = vld [vmem:[%s0 + $0x8] sm:$0xff]
  %v17 = vpack.c.bf16 %v16, %v15
  %v18 = vld [vmem:[%s1] sm:$0xf]
  %v19 = vld [vmem:[%s1 + $0x4] sm:$0xf]
  %v20 = vld [vmem:[%s1 + $0x8] sm:$0xf]
  %v21 = vld [vmem:[%s1 + $0xc] sm:$0xf]
  %v22 = vld [vmem:[%s2] sm:$0x1]
  %v24 = vlaneseq
  %v25 = vshrl.u32 %v24, 7
  %v26 = vsub.s32 0, %v25
  %v27 = vrot.slane %v22, %v26
  %v33 = vunpack.c.l.b16 %v18
  %v34 = vunpack.c.l.b16 %v19
  %v35 = vunpack.c.l.b16 %v20
  %v36 = vunpack.c.l.b16 %v21
  %v37 = vpack.c.b16 %v34, %v33
  %v38 = vpack.c.b16 %v36, %v35
  %vm41 = vcmask 261120
  %v43 = vsel %vm41, %v17, 0
  %45 = vmatprep.subr.bf16.mxu0 0
  %46 = vmatpush1.bf16.msra.mxu0 %v37
  %47 = vmatprep.subr.bf16.mxu0 0
  %48 = vmatpush1.bf16.msra.mxu0 %v38
  %49 = vmatprep.subr.bf16.mxu0 0
  %50 = vmatpush1.bf16.msra.mxu0 0
  %51 = vmatprep.subr.bf16.mxu0 0
  %52 = vmatpush1.bf16.msra.mxu0 0
  %53 = vmatprep.subr.bf16.mxu0 0
  %54 = vmatpush1.bf16.msra.mxu0 0
  %55 = vmatprep.subr.bf16.mxu0 0
  %56 = vmatpush1.bf16.msra.mxu0 0
  %57 = vmatprep.subr.bf16.mxu0 0
  %58 = vmatpush1.bf16.msra.mxu0 0
  %59 = vmatprep.subr.bf16.mxu0 0
  %60 = vmatpush1.bf16.msra.mxu0 0
  %61 = vmatprep.subr.bf16.mxu0 0
  %62 = vmatpush1.bf16.msra.mxu0 0
  %63 = vmatprep.subr.bf16.mxu0 0
  %64 = vmatpush1.bf16.msra.mxu0 0
  %65 = vmatprep.subr.bf16.mxu0 0
  %66 = vmatpush1.bf16.msra.mxu0 0
  %67 = vmatprep.subr.bf16.mxu0 0
  %68 = vmatpush1.bf16.msra.mxu0 0
  %69 = vmatprep.subr.bf16.mxu0 0
  %70 = vmatpush1.bf16.msra.mxu0 0
  %71 = vmatprep.subr.bf16.mxu0 0
  %72 = vmatpush1.bf16.msra.mxu0 0
  %73 = vmatprep.subr.bf16.mxu0 0
  %74 = vmatpush1.bf16.msra.mxu0 0
  %75 = vmatprep.subr.bf16.mxu0 0
  %76 = vmatpush1.bf16.msra.mxu0 0
  %77 = vmatprep.mubr.bf16.mxu0 0
  %78 = vmatmul.mubr.bf16.gmra.mrb[0].mxu0 %v43
  %v79 = vpop.f32.mrb[0].mxu0
  %v80 = vadd.f32 %v27, %v79
  %v81 = vpop.f32.mrb[0].mxu0
  %v82 = vpop.f32.mrb[0].mxu0
  %v83 = vadd.f32 %v27, %v82
  %v84 = vpop.f32.mrb[0].mxu0
  %85 = vdwg.mxu0
  %86 = vst.msk [vmem:[%s3] sm:$0xff] %vm41, %v80
  %87 = vst.msk [vmem:[%s3 + $0x8] sm:$0xff] %vm41, %v83
  // Predicated region
  $region14: #{multi_head_attention.5} parent=0 // pred_check
    _
  $region15: #{multi_head_attention.5} parent=0 // pred_check_branch
    %89 = sbr.rel (0) target = $region17
  $region16: #{multi_head_attention.5} parent=0 // pred_region
    _
  $region17: #{multi_head_attention.5} parent=0 // pred_fallthru
    _
  // Predicated region
  $region18: #{multi_head_attention.5} parent=0 // pred_check
    _
  $region19: #{multi_head_attention.5} parent=0 // pred_check_branch
    %91 = sbr.rel (0) target = $region21
  $region20: #{multi_head_attention.5} parent=0 // pred_region
    _
  $region21: #{multi_head_attention.5} parent=0 // pred_fallthru
    _

// kernel: multi_head_attention.7
$region0: #{multi_head_attention.7}
  #allocation0 [shape = 'u32[]', space=smem, size = 0x4, offset = 0x4, fixed_abs, tag = 'smem constant byte address 0x4 - core index']
  #allocation1 [shape = 'u32[144,128]{1,0:T(1,128)}', space=vmem, size = 0x12000, scoped, tag = 'internal scratch']
  %s0 = inlined_call_operand.vmem [shape: f32[2,8,4,8], index: 0, kind: input, shape index: {}]
  %s1 = inlined_call_operand.vmem [shape: f32[2,8,4,8], index: 1, kind: input, shape index: {}]
  %s2 = inlined_call_operand.vmem [shape: f32[2,8,4,8], index: 2, kind: input, shape index: {}]
  %s3 = inlined_call_operand.vmem [shape: bf16[32,32], index: 3, kind: input, shape index: {}]
  %s4 = inlined_call_operand.vmem [shape: f32[1,32], index: 4, kind: input, shape index: {}]
  %s5 = inlined_call_operand.hbm [shape: f32[2,8,32], index: 5, kind: output, shape index: {}]
  %s6 = sld [smem:[#allocation0]]
  $region53: #{multi_head_attention.7} parent=0
    _
  %s8 = ssub.s32 1, %s6
  %s9 = scalar_select 0, %s8, %s6
  $region1: #{multi_head_attention.7} parent=0
    #allocation2 [shape = 'u8[8192]{0}', space=vmem, size = 0x2000, scoped, tag = 'output window, operand 0']
    #allocation3 [shape = 's32[2]{0}', space=sflag, size = 0x8, scoped, tag = 'scoped memory for multi_head_attention.7']
    %10 = vsyncpa [#allocation3], 0
    %s11 = scalar_lea.sflag [#allocation3], 1
    %12 = vsyncpa %s11, 0
    loop: start=0, step=1, limit=4
    $region2: #{multi_head_attention.7} parent=1 // loop_pre_header
      _
    $region3: #{multi_head_attention.7} parent=1 // loop_header
      %s14 = sphi 0, %s18
      %p15 = scmp.ge.s32.totalorder %s14, 4
      %s21 = sphi 0, %s33
      %s22 = sphi 0, %s29
      %s23 = sphi 0, %s21
      %s24 = sphi 0, %s22
      %s25 = sphi 0, %s23
      %s26 = sphi 0, %s24
      %s38 = sphi 0, %s40
      %s41 = sphi 0, %s38
      %s42 = sphi 0, %s41
      %s58 = sphi 0, %s42
      %s64 = sphi 0, %s66
      %s67 = sphi 0, %s64
      %s68 = sphi 0, %s67
      %s84 = sphi 0, %s68
      %s90 = sphi 0, %s92
      %s93 = sphi 0, %s90
      %s94 = sphi 0, %s93
      %s110 = sphi 0, %s94
      %s114 = sphi 0, %s114
      %s116 = sphi 0, %s114
      %s117 = sphi 0, %s116
      %s131 = sphi 0, %s117
      %s135 = sphi 0, %s135
      %s137 = sphi 0, %s135
      %s138 = sphi 0, %s137
      %s152 = sphi 0, %s138
      %s160 = sphi 0, %s162
      %s163 = sphi 0, %s160
      %s164 = sphi 0, %s163
      %s180 = sphi 0, %s164
    $region4: #{multi_head_attention.7} parent=1 // loop_header_branch
      %17 = sbr.rel (%p15) target = $region8
    $region5: #{multi_head_attention.7} parent=1 // loop_body
      %s19 = ssub.s32 %s14, 1
      %s20 = ssub.s32 %s14, 2
      %s27 = sadd.s32 1, %s22
      %p28 = scmp.ge.s32.totalorder %s27, 1
      %s29 = scalar_select %p28, 0, %s27
      %s30 = sadd.s32 1, %s21
      %s31 = scalar_select %p28, %s30, %s21
      %p32 = scmp.ge.s32.totalorder %s31, 2
      %s33 = scalar_select %p32, 0, %s31
      %s34 = ssub.s32 %s21, %s33
      %s35 = ssub.s32 %s22, %s29
      %s36 = sor.u32 %s34, %s35
      %p37 = scmp.eq.s32.totalorder %s36, 0
      %s39 = sadd.s32 %s38, 1
      %s40 = scalar_select %p37, %s38, %s39
      %p43 = pneg %p37
      %p44 = scmp.eq.s32.totalorder %s14, 1
      %p45 = por %p43, %p44
      %p46 = scmp.ne.s32.totalorder %s38, %s41
      %p47 = scmp.eq.s32.totalorder %s14, 0
      %p48 = por %p46, %p47
      %p49 = scmp.ne.s32.totalorder %s38, %s41
      %p50 = scmp.eq.s32.totalorder %s19, 1
      %p51 = por %p49, %p50
      %p52 = scmp.ne.s32.totalorder %s41, %s42
      %p53 = scmp.eq.s32.totalorder %s19, 0
      %p54 = por %p52, %p53
      %p55 = scmp.ne.s32.totalorder %s41, %s42
      %p56 = scmp.eq.s32.totalorder %s20, 1
      %p57 = por %p55, %p56
      %p59 = scmp.ne.s32.totalorder %s42, %s58
      %p60 = scmp.eq.s32.totalorder %s20, 0
      %p61 = por %p59, %p60
      %s62 = ssub.s32 %s21, %s33
      %p63 = scmp.eq.s32.totalorder %s62, 0
      %s65 = sadd.s32 %s64, 1
      %s66 = scalar_select %p63, %s64, %s65
      %p69 = pneg %p63
      %p70 = scmp.eq.s32.totalorder %s14, 1
      %p71 = por %p69, %p70
      %p72 = scmp.ne.s32.totalorder %s64, %s67
      %p73 = scmp.eq.s32.totalorder %s14, 0
      %p74 = por %p72, %p73
      %p75 = scmp.ne.s32.totalorder %s64, %s67
      %p76 = scmp.eq.s32.totalorder %s19, 1
      %p77 = por %p75, %p76
      %p78 = scmp.ne.s32.totalorder %s67, %s68
      %p79 = scmp.eq.s32.totalorder %s19, 0
      %p80 = por %p78, %p79
      %p81 = scmp.ne.s32.totalorder %s67, %s68
      %p82 = scmp.eq.s32.totalorder %s20, 1
      %p83 = por %p81, %p82
      %p85 = scmp.ne.s32.totalorder %s68, %s84
      %p86 = scmp.eq.s32.totalorder %s20, 0
      %p87 = por %p85, %p86
      %s88 = ssub.s32 %s21, %s33
      %p89 = scmp.eq.s32.totalorder %s88, 0
      %s91 = sadd.s32 %s90, 1
      %s92 = scalar_select %p89, %s90, %s91
      %p95 = pneg %p89
      %p96 = scmp.eq.s32.totalorder %s14, 1
      %p97 = por %p95, %p96
      %p98 = scmp.ne.s32.totalorder %s90, %s93
      %p99 = scmp.eq.s32.totalorder %s14, 0
      %p100 = por %p98, %p99
      %p101 = scmp.ne.s32.totalorder %s90, %s93
      %p102 = scmp.eq.s32.totalorder %s19, 1
      %p103 = por %p101, %p102
      %p104 = scmp.ne.s32.totalorder %s93, %s94
      %p105 = scmp.eq.s32.totalorder %s19, 0
      %p106 = por %p104, %p105
      %p107 = scmp.ne.s32.totalorder %s93, %s94
      %p108 = scmp.eq.s32.totalorder %s20, 1
      %p109 = por %p107, %p108
      %p111 = scmp.ne.s32.totalorder %s94, %s110
      %p112 = scmp.eq.s32.totalorder %s20, 0
      %p113 = por %p111, %p112
      %s115 = sadd.s32 %s114, 1
      %p118 = scmp.eq.s32.totalorder %s14, 1
      %p119 = scmp.ne.s32.totalorder %s114, %s116
      %p120 = scmp.eq.s32.totalorder %s14, 0
      %p121 = por %p119, %p120
      %p122 = scmp.ne.s32.totalorder %s114, %s116
      %p123 = scmp.eq.s32.totalorder %s19, 1
      %p124 = por %p122, %p123
      %p125 = scmp.ne.s32.totalorder %s116, %s117
      %p126 = scmp.eq.s32.totalorder %s19, 0
      %p127 = por %p125, %p126
      %p128 = scmp.ne.s32.totalorder %s116, %s117
      %p129 = scmp.eq.s32.totalorder %s20, 1
      %p130 = por %p128, %p129
      %p132 = scmp.ne.s32.totalorder %s117, %s131
      %p133 = scmp.eq.s32.totalorder %s20, 0
      %p134 = por %p132, %p133
      %s136 = sadd.s32 %s135, 1
      %p139 = scmp.eq.s32.totalorder %s14, 1
      %p140 = scmp.ne.s32.totalorder %s135, %s137
      %p141 = scmp.eq.s32.totalorder %s14, 0
      %p142 = por %p140, %p141
      %p143 = scmp.ne.s32.totalorder %s135, %s137
      %p144 = scmp.eq.s32.totalorder %s19, 1
      %p145 = por %p143, %p144
      %p146 = scmp.ne.s32.totalorder %s137, %s138
      %p147 = scmp.eq.s32.totalorder %s19, 0
      %p148 = por %p146, %p147
      %p149 = scmp.ne.s32.totalorder %s137, %s138
      %p150 = scmp.eq.s32.totalorder %s20, 1
      %p151 = por %p149, %p150
      %p153 = scmp.ne.s32.totalorder %s138, %s152
      %p154 = scmp.eq.s32.totalorder %s20, 0
      %p155 = por %p153, %p154
      %s156 = ssub.s32 %s21, %s33
      %s157 = ssub.s32 %s22, %s29
      %s158 = sor.u32 %s156, %s157
      %p159 = scmp.eq.s32.totalorder %s158, 0
      %s161 = sadd.s32 %s160, 1
      %s162 = scalar_select %p159, %s160, %s161
      %p165 = pneg %p159
      %p166 = scmp.eq.s32.totalorder %s14, 1
      %p167 = por %p165, %p166
      %p168 = scmp.ne.s32.totalorder %s160, %s163
      %p169 = scmp.eq.s32.totalorder %s14, 0
      %p170 = por %p168, %p169
      %p171 = scmp.ne.s32.totalorder %s160, %s163
      %p172 = scmp.eq.s32.totalorder %s19, 1
      %p173 = por %p171, %p172
      %p174 = scmp.ne.s32.totalorder %s163, %s164
      %p175 = scmp.eq.s32.totalorder %s19, 0
      %p176 = por %p174, %p175
      %p177 = scmp.ne.s32.totalorder %s163, %s164
      %p178 = scmp.eq.s32.totalorder %s20, 1
      %p179 = por %p177, %p178
      %p181 = scmp.ne.s32.totalorder %s164, %s180
      %p182 = scmp.eq.s32.totalorder %s20, 0
      %p183 = por %p181, %p182
      %p184 = scmp.le.s32.totalorder 1, %s14
      %p185 = scmp.lt.s32.totalorder %s14, 3
      %p186 = pnand %p184, %p185
      %p187 = pneg %p186
      // Predicated region
      $region9: #{multi_head_attention.7} parent=5 // pred_check
        _
      $region10: #{multi_head_attention.7} parent=5 // pred_check_branch
        %189 = sbr.rel (%p186) target = $region12
      $region11: #{multi_head_attention.7} parent=5 // pred_region
        %s190 = ssub.s32 %s14, 1
        // Predicated region
        $region13: #{multi_head_attention.7} parent=11 // pred_check
          %p191 = pneg %p127
        $region14: #{multi_head_attention.7} parent=11 // pred_check_branch
          %193 = sbr.rel (%p191) target = $region16
        $region15: #{multi_head_attention.7} parent=11 // pred_region
          _
        $region16: #{multi_head_attention.7} parent=11 // pred_fallthru
          _
        // Predicated region
        $region17: #{multi_head_attention.7} parent=11 // pred_check
          %p194 = pneg %p148
        $region18: #{multi_head_attention.7} parent=11 // pred_check_branch
          %196 = sbr.rel (%p194) target = $region20
        $region19: #{multi_head_attention.7} parent=11 // pred_region
          _
        $region20: #{multi_head_attention.7} parent=11 // pred_fallthru
          _
      $region12: #{multi_head_attention.7} parent=5 // pred_fallthru
        _
      %p197 = scmp.lt.s32.totalorder %s14, 2
      // Predicated region
      $region21: #{multi_head_attention.7} parent=5 // pred_check
        %p198 = pneg %p197
      $region22: #{multi_head_attention.7} parent=5 // pred_check_branch
        %200 = sbr.rel (%p198) target = $region24
      $region23: #{multi_head_attention.7} parent=5 // pred_region
        // Predicated region
        $region25: #{multi_head_attention.7} parent=23 // pred_check
          %p201 = pneg %p48
        $region26: #{multi_head_attention.7} parent=23 // pred_check_branch
          %203 = sbr.rel (%p201) target = $region28
        $region27: #{multi_head_attention.7} parent=23 // pred_region
          %s204 = smul.u32 8, %s22
          %p205 = scmp.lt.s32.totalorder %s21, 1
          %s206 = scalar_select %p205, %s21, 1
          %p207 = scmp.lt.s32.totalorder %s204, 7
          %s208 = scalar_select %p207, %s204, 7
          %s209 = smul.addr %s206, 8
          %s210 = sadd.s32 %s208, %s209
          %s211 = smul.addr %s210, 4
          %s212 = scalar_lea.vmem %s0, %s211
          %s213 = smul.u32 8, %s22
        $region28: #{multi_head_attention.7} parent=23 // pred_fallthru
          _
        // Predicated region
        $region29: #{multi_head_attention.7} parent=23 // pred_check
          %p214 = pneg %p74
        $region30: #{multi_head_attention.7} parent=23 // pred_check_branch
          %216 = sbr.rel (%p214) target = $region32
        $region31: #{multi_head_attention.7} parent=23 // pred_region
          %p217 = scmp.lt.s32.totalorder %s21, 1
          %s218 = scalar_select %p217, %s21, 1
          %s219 = smul.addr %s218, 8
          %s220 = smul.addr %s219, 4
          %s221 = scalar_lea.vmem %s1, %s220
        $region32: #{multi_head_attention.7} parent=23 // pred_fallthru
          _
        // Predicated region
        $region33: #{multi_head_attention.7} parent=23 // pred_check
          %p222 = pneg %p100
        $region34: #{multi_head_attention.7} parent=23 // pred_check_branch
          %224 = sbr.rel (%p222) target = $region36
        $region35: #{multi_head_attention.7} parent=23 // pred_region
          %p225 = scmp.lt.s32.totalorder %s21, 1
          %s226 = scalar_select %p225, %s21, 1
          %s227 = smul.addr %s226, 8
          %s228 = smul.addr %s227, 4
          %s229 = scalar_lea.vmem %s2, %s228
        $region36: #{multi_head_attention.7} parent=23 // pred_fallthru
          _
      $region24: #{multi_head_attention.7} parent=5 // pred_fallthru
        _
      %p230 = scmp.le.s32.totalorder 1, %s14
      %p231 = scmp.lt.s32.totalorder %s14, 3
      %p232 = pnand %p230, %p231
      %p233 = pneg %p232
      // Predicated region
      $region37: #{multi_head_attention.7} parent=5 // pred_check
        _
      $region38: #{multi_head_attention.7} parent=5 // pred_check_branch
        %235 = sbr.rel (%p232) target = $region40
      $region39: #{multi_head_attention.7} parent=5 // pred_region
        %s236 = ssub.s32 %s14, 1
        %s237 = smul.u32 8, %s24
        %p238 = scmp.lt.s32.totalorder %s23, 1
        %s239 = scalar_select %p238, %s23, 1
        %p240 = scmp.lt.s32.totalorder %s237, 7
        %s241 = scalar_select %p240, %s237, 7
        %s242 = smul.addr %s239, 8
        %s243 = sadd.s32 %s241, %s242
        %s244 = smul.addr %s243, 4
        %s245 = scalar_lea.vmem %s0, %s244
        %p246 = pneg %p54
        %p247 = pneg %p51
        %p248 = scmp.lt.s32.totalorder %s23, 1
        %s249 = scalar_select %p248, %s23, 1
        %s250 = smul.addr %s249, 8
        %s251 = smul.addr %s250, 4
        %s252 = scalar_lea.vmem %s1, %s251
        %p253 = pneg %p80
        %p254 = pneg %p77
        %p255 = scmp.lt.s32.totalorder %s23, 1
        %s256 = scalar_select %p255, %s23, 1
        %s257 = smul.addr %s256, 8
        %s258 = smul.addr %s257, 4
        %s259 = scalar_lea.vmem %s2, %s258
        %p260 = pneg %p106
        %p261 = pneg %p103
        %p262 = pneg %p127
        %p263 = pneg %p124
        %p264 = pneg %p148
        %p265 = pneg %p145
        %p266 = pneg %p176
        %p267 = pneg %p173
        %s268 = sand.u32 %s163, 1
        %s269 = scalar_lea.sflag [#allocation3], %s268
        %s270 = sand.u32 %s163, 1
        %s271 = smul.addr %s270, 8
        %s272 = scalar_lea.vmem [#allocation2], %s271
        %s273 = smul.u32 8, %s24
        %p274 = scmp.lt.s32.totalorder %s23, 1
        %s275 = scalar_select %p274, %s23, 1
        %p276 = scmp.lt.s32.totalorder %s273, 7
        %s277 = scalar_select %p276, %s273, 7
        %s278 = smul.addr %s275, 8
        %s279 = sadd.s32 %s277, %s278
        %s280 = smul.addr %s279, 4
        %s281 = scalar_lea.vmem %s0, %s280
        %s282 = smul.u32 8, %s24
        %p283 = scmp.lt.s32.totalorder %s23, 1
        %s284 = scalar_select %p283, %s23, 1
        %s285 = smul.addr %s284, 8
        %s286 = smul.addr %s285, 4
        %s287 = scalar_lea.vmem %s1, %s286
        %p288 = scmp.lt.s32.totalorder %s23, 1
        %s289 = scalar_select %p288, %s23, 1
        %s290 = smul.addr %s289, 8
        %s291 = smul.addr %s290, 4
        %s292 = scalar_lea.vmem %s2, %s291
        %v294 = vld [vmem:[%s281] sm:$0xf]
        %v295 = vld [vmem:[%s281 + $0x4] sm:$0xf]
        %v296 = vld [vmem:[%s281 + $0x8] sm:$0xf]
        %v297 = vld [vmem:[%s281 + $0xc] sm:$0xf]
        %v298 = vld [vmem:[%s281 + $0x10] sm:$0xf]
        %v299 = vld [vmem:[%s281 + $0x14] sm:$0xf]
        %v300 = vld [vmem:[%s281 + $0x18] sm:$0xf]
        %v301 = vld [vmem:[%s281 + $0x1c] sm:$0xf]
        %v302 = vld [vmem:[%s287] sm:$0xf]
        %v303 = vld [vmem:[%s287 + $0x4] sm:$0xf]
        %v304 = vld [vmem:[%s287 + $0x8] sm:$0xf]
        %v305 = vld [vmem:[%s287 + $0xc] sm:$0xf]
        %v306 = vld [vmem:[%s287 + $0x10] sm:$0xf]
        %v307 = vld [vmem:[%s287 + $0x14] sm:$0xf]
        %v308 = vld [vmem:[%s287 + $0x18] sm:$0xf]
        %v309 = vld [vmem:[%s287 + $0x1c] sm:$0xf]
        %v310 = vld [vmem:[%s292] sm:$0xf]
        %v311 = vld [vmem:[%s292 + $0x4] sm:$0xf]
        %v312 = vld [vmem:[%s292 + $0x8] sm:$0xf]
        %v313 = vld [vmem:[%s292 + $0xc] sm:$0xf]
        %v314 = vld [vmem:[%s292 + $0x10] sm:$0xf]
        %v315 = vld [vmem:[%s292 + $0x14] sm:$0xf]
        %v316 = vld [vmem:[%s292 + $0x18] sm:$0xf]
        %v317 = vld [vmem:[%s292 + $0x1c] sm:$0xf]
        %v318 = vpack.c.bf16 %v294, %v294
        %v319 = vpack.c.bf16 %v295, %v295
        %v320 = vpack.c.bf16 %v296, %v296
        %v321 = vpack.c.bf16 %v297, %v297
        %v322 = vpack.c.bf16 %v298, %v298
        %v323 = vpack.c.bf16 %v299, %v299
        %v324 = vpack.c.bf16 %v300, %v300
        %v325 = vpack.c.bf16 %v301, %v301
        %v326 = vpack.c.bf16 %v302, %v302
        %v327 = vpack.c.bf16 %v303, %v303
        %v328 = vpack.c.bf16 %v304, %v304
        %v329 = vpack.c.bf16 %v305, %v305
        %v330 = vpack.c.bf16 %v306, %v306
        %v331 = vpack.c.bf16 %v307, %v307
        %v332 = vpack.c.bf16 %v308, %v308
        %v333 = vpack.c.bf16 %v309, %v309
        %v334 = vpack.c.bf16 %v310, %v310
        %v335 = vpack.c.bf16 %v311, %v311
        %v336 = vpack.c.bf16 %v312, %v312
        %v337 = vpack.c.bf16 %v313, %v313
        %v338 = vpack.c.bf16 %v314, %v314
        %v339 = vpack.c.bf16 %v315, %v315
        %v340 = vpack.c.bf16 %v316, %v316
        %v341 = vpack.c.bf16 %v317, %v317
        %v342 = vcombine.low %v318, %v322
        %v344 = vunpack.c.l.s4 1983009808
        %v345 = vunpack.c.0.s8 %v344
        %v346 = vlaneseq
        %v347 = vshrl.u32 %v346, 7
        %v348 = vsub.s32 %v345, %v347
        %v349 = vrot.slane %v342, %v348
        %v350 = vcombine.low %v320, %v324
        %v352 = vunpack.c.l.s4 1983009808
        %v353 = vunpack.c.0.s8 %v352
        %v354 = vlaneseq
        %v355 = vshrl.u32 %v354, 7
        %v356 = vsub.s32 %v353, %v355
        %v357 = vrot.slane %v350, %v356
        %v358 = vcombine.low %v349, %v357
        %v360 = vunpack.c.l.s4 1934713408
        %v361 = vunpack.c.0.s8 %v360
        %v362 = vlaneseq
        %v363 = vshrl.u32 %v362, 7
        %v364 = vsub.s32 %v361, %v363
        %v365 = vrot.slane %v358, %v364
        %v366 = vcombine.high %v365, 0
        %v367 = vcombine.low %v319, %v323
        %v369 = vunpack.c.l.s4 1983009808
        %v370 = vunpack.c.0.s8 %v369
        %v371 = vlaneseq
        %v372 = vshrl.u32 %v371, 7
        %v373 = vsub.s32 %v370, %v372
        %v374 = vrot.slane %v367, %v373
        %v375 = vcombine.low %v321, %v325
        %v377 = vunpack.c.l.s4 1983009808
        %v378 = vunpack.c.0.s8 %v377
        %v379 = vlaneseq
        %v380 = vshrl.u32 %v379, 7
        %v381 = vsub.s32 %v378, %v380
        %v382 = vrot.slane %v375, %v381
        %v383 = vcombine.low %v374, %v382
        %v385 = vunpack.c.l.s4 1934713408
        %v386 = vunpack.c.0.s8 %v385
        %v387 = vlaneseq
        %v388 = vshrl.u32 %v387, 7
        %v389 = vsub.s32 %v386, %v388
        %v390 = vrot.slane %v383, %v389
        %v391 = vcombine.high %v390, 0
        %v394 = vpack.i.b16 %v390, %v365
        %v395 = vshrl.u32 %v365, 16
        %v396 = vshrl.u32 %v390, 16
        %v397 = vpack.i.b16 %v396, %v395
        %v400 = vpack.i.b16 %v391, %v366
        %v401 = vshrl.u32 %v366, 16
        %v402 = vshrl.u32 %v391, 16
        %v403 = vpack.i.b16 %v402, %v401
        %404 = vxpose.xlu0.c.b16.start [1/8] %v326, 128
        %405 = vxpose.xlu0.c.b16.cont [2/8] 0, 128
        %406 = vxpose.xlu0.c.b16.cont [3/8] 0, 128
        %407 = vxpose.xlu0.c.b16.cont [4/8] 0, 128
        %408 = vxpose.xlu0.c.b16.cont [5/8] 0, 128
        %409 = vxpose.xlu0.c.b16.cont [6/8] 0, 128
        %410 = vxpose.xlu0.c.b16.cont [7/8] 0, 128
        %411 = vxpose.xlu0.c.b16.end [8/8] 0, 128
        %v412 = vpop.trf.xlu0
        %v413 = vpop.trf.xlu0
        %v414 = vpop.trf.xlu0
        %v415 = vpop.trf.xlu0
        %v416 = vpop.trf.xlu0
        %v417 = vpop.trf.xlu0
        %v418 = vpop.trf.xlu0
        %v419 = vpop.trf.xlu0
        %420 = vxpose.xlu0.c.b16.start [1/8] %v327, 128
        %421 = vxpose.xlu0.c.b16.cont [2/8] 0, 128
        %422 = vxpose.xlu0.c.b16.cont [3/8] 0, 128
        %423 = vxpose.xlu0.c.b16.cont [4/8] 0, 128
        %424 = vxpose.xlu0.c.b16.cont [5/8] 0, 128
        %425 = vxpose.xlu0.c.b16.cont [6/8] 0, 128
        %426 = vxpose.xlu0.c.b16.cont [7/8] 0, 128
        %427 = vxpose.xlu0.c.b16.end [8/8] 0, 128
        %v428 = vpop.trf.xlu0
        %v429 = vpop.trf.xlu0
        %v430 = vpop.trf.xlu0
        %v431 = vpop.trf.xlu0
        %v432 = vpop.trf.xlu0
        %v433 = vpop.trf.xlu0
        %v434 = vpop.trf.xlu0
        %v435 = vpop.trf.xlu0
        %436 = vxpose.xlu0.c.b16.start [1/8] %v328, 128
        %437 = vxpose.xlu0.c.b16.cont [2/8] 0, 128
        %438 = vxpose.xlu0.c.b16.cont [3/8] 0, 128
        %439 = vxpose.xlu0.c.b16.cont [4/8] 0, 128
        %440 = vxpose.xlu0.c.b16.cont [5/8] 0, 128
        %441 = vxpose.xlu0.c.b16.cont [6/8] 0, 128
        %442 = vxpose.xlu0.c.b16.cont [7/8] 0, 128
        %443 = vxpose.xlu0.c.b16.end [8/8] 0, 128
        %v444 = vpop.trf.xlu0
        %v445 = vpop.trf.xlu0
        %v446 = vpop.trf.xlu0
        %v447 = vpop.trf.xlu0
        %v448 = vpop.trf.xlu0
        %v449 = vpop.trf.xlu0
        %v450 = vpop.trf.xlu0
        %v451 = vpop.trf.xlu0
        %452 = vxpose.xlu0.c.b16.start [1/8] %v329, 128
        %453 = vxpose.xlu0.c.b16.cont [2/8] 0, 128
        %454 = vxpose.xlu0.c.b16.cont [3/8] 0, 128
        %455 = vxpose.xlu0.c.b16.cont [4/8] 0, 128
        %456 = vxpose.xlu0.c.b16.cont [5/8] 0, 128
        %457 = vxpose.xlu0.c.b16.cont [6/8] 0, 128
        %458 = vxpose.xlu0.c.b16.cont [7/8] 0, 128
        %459 = vxpose.xlu0.c.b16.end [8/8] 0, 128
        %v460 = vpop.trf.xlu0
        %v461 = vpop.trf.xlu0
        %v462 = vpop.trf.xlu0
        %v463 = vpop.trf.xlu0
        %v464 = vpop.trf.xlu0
        %v465 = vpop.trf.xlu0
        %v466 = vpop.trf.xlu0
        %v467 = vpop.trf.xlu0
        %468 = vxpose.xlu0.c.b16.start [1/8] %v330, 128
        %469 = vxpose.xlu0.c.b16.cont [2/8] 0, 128
        %470 = vxpose.xlu0.c.b16.cont [3/8] 0, 128
        %471 = vxpose.xlu0.c.b16.cont [4/8] 0, 128
        %472 = vxpose.xlu0.c.b16.cont [5/8] 0, 128
        %473 = vxpose.xlu0.c.b16.cont [6/8] 0, 128
        %474 = vxpose.xlu0.c.b16.cont [7/8] 0, 128
        %475 = vxpose.xlu0.c.b16.end [8/8] 0, 128
        %v476 = vpop.trf.xlu0
        %v477 = vpop.trf.xlu0
        %v478 = vpop.trf.xlu0
        %v479 = vpop.trf.xlu0
        %v480 = vpop.trf.xlu0
        %v481 = vpop.trf.xlu0
        %v482 = vpop.trf.xlu0
        %v483 = vpop.trf.xlu0
        %484 = vxpose.xlu0.c.b16.start [1/8] %v331, 128
        %485 = vxpose.xlu0.c.b16.cont [2/8] 0, 128
        %486 = vxpose.xlu0.c.b16.cont [3/8] 0, 128
        %487 = vxpose.xlu0.c.b16.cont [4/8] 0, 128
        %488 = vxpose.xlu0.c.b16.cont [5/8] 0, 128
        %489 = vxpose.xlu0.c.b16.cont [6/8] 0, 128
        %490 = vxpose.xlu0.c.b16.cont [7/8] 0, 128
        %491 = vxpose.xlu0.c.b16.end [8/8] 0, 128
        %v492 = vpop.trf.xlu0
        %v493 = vpop.trf.xlu0
        %v494 = vpop.trf.xlu0
        %v495 = vpop.trf.xlu0
        %v496 = vpop.trf.xlu0
        %v497 = vpop.trf.xlu0
        %v498 = vpop.trf.xlu0
        %v499 = vpop.trf.xlu0
        %500 = vxpose.xlu0.c.b16.start [1/8] %v332, 128
        %501 = vxpose.xlu0.c.b16.cont [2/8] 0, 128
        %502 = vxpose.xlu0.c.b16.cont [3/8] 0, 128
        %503 = vxpose.xlu0.c.b16.cont [4/8] 0, 128
        %504 = vxpose.xlu0.c.b16.cont [5/8] 0, 128
        %505 = vxpose.xlu0.c.b16.cont [6/8] 0, 128
        %506 = vxpose.xlu0.c.b16.cont [7/8] 0, 128
        %507 = vxpose.xlu0.c.b16.end [8/8] 0, 128
        %v508 = vpop.trf.xlu0
        %v509 = vpop.trf.xlu0
        %v510 = vpop.trf.xlu0
        %v511 = vpop.trf.xlu0
        %v512 = vpop.trf.xlu0
        %v513 = vpop.trf.xlu0
        %v514 = vpop.trf.xlu0
        %v515 = vpop.trf.xlu0
        %516 = vxpose.xlu0.c.b16.start [1/8] %v333, 128
        %517 = vxpose.xlu0.c.b16.cont [2/8] 0, 128
        %518 = vxpose.xlu0.c.b16.cont [3/8] 0, 128
        %519 = vxpose.xlu0.c.b16.cont [4/8] 0, 128
        %520 = vxpose.xlu0.c.b16.cont [5/8] 0, 128
        %521 = vxpose.xlu0.c.b16.cont [6/8] 0, 128
        %522 = vxpose.xlu0.c.b16.cont [7/8] 0, 128
        %523 = vxpose.xlu0.c.b16.end [8/8] 0, 128
        %v524 = vpop.trf.xlu0
        %v525 = vpop.trf.xlu0
        %v526 = vpop.trf.xlu0
        %v527 = vpop.trf.xlu0
        %v528 = vpop.trf.xlu0
        %v529 = vpop.trf.xlu0
        %v530 = vpop.trf.xlu0
        %v531 = vpop.trf.xlu0
        %v532 = vcombine.low %v412, %v476
        %v534 = vunpack.c.l.s4 1983009808
        %v535 = vunpack.c.0.s8 %v534
        %v536 = vlaneseq
        %v537 = vshrl.u32 %v536, 7
        %v538 = vsub.s32 %v535, %v537
        %v539 = vrot.slane %v532, %v538
        %v540 = vcombine.low %v444, %v508
        %v542 = vunpack.c.l.s4 1983009808
        %v543 = vunpack.c.0.s8 %v542
        %v544 = vlaneseq
        %v545 = vshrl.u32 %v544, 7
        %v546 = vsub.s32 %v543, %v545
        %v547 = vrot.slane %v540, %v546
        %v548 = vcombine.low %v539, %v547
        %v549 = vcombine.high %v539, %v547
        %v551 = vunpack.c.l.s4 1934713408
        %v552 = vunpack.c.0.s8 %v551
        %v553 = vlaneseq
        %v554 = vshrl.u32 %v553, 7
        %v555 = vsub.s32 %v552, %v554
        %v556 = vrot.slane %v548, %v555
        %v558 = vunpack.c.l.s4 1934713408
        %v559 = vunpack.c.0.s8 %v558
        %v560 = vlaneseq
        %v561 = vshrl.u32 %v560, 7
        %v562 = vsub.s32 %v559, %v561
        %v563 = vrot.slane %v549, %v562
        %v564 = vcombine.high %v556, 0
        %v565 = vcombine.high %v563, 0
        %v566 = vcombine.low %v428, %v492
        %v568 = vunpack.c.l.s4 1983009808
        %v569 = vunpack.c.0.s8 %v568
        %v570 = vlaneseq
        %v571 = vshrl.u32 %v570, 7
        %v572 = vsub.s32 %v569, %v571
        %v573 = vrot.slane %v566, %v572
        %v574 = vcombine.low %v460, %v524
        %v576 = vunpack.c.l.s4 1983009808
        %v577 = vunpack.c.0.s8 %v576
        %v578 = vlaneseq
        %v579 = vshrl.u32 %v578, 7
        %v580 = vsub.s32 %v577, %v579
        %v581 = vrot.slane %v574, %v580
        %v582 = vcombine.low %v573, %v581
        %v583 = vcombine.high %v573, %v581
        %v585 = vunpack.c.l.s4 1934713408
        %v586 = vunpack.c.0.s8 %v585
        %v587 = vlaneseq
        %v588 = vshrl.u32 %v587, 7
        %v589 = vsub.s32 %v586, %v588
        %v590 = vrot.slane %v582, %v589
        %v592 = vunpack.c.l.s4 1934713408
        %v593 = vunpack.c.0.s8 %v592
        %v594 = vlaneseq
        %v595 = vshrl.u32 %v594, 7
        %v596 = vsub.s32 %v593, %v595
        %v597 = vrot.slane %v583, %v596
        %v598 = vcombine.high %v590, 0
        %v599 = vcombine.high %v597, 0
        %v602 = vpack.i.b16 %v590, %v556
        %v604 = vshrl.u32 %v556, 16
        %v605 = vshrl.u32 %v590, 16
        %v606 = vpack.i.b16 %v605, %v604
        %v610 = vpack.i.b16 %v598, %v564
        %v612 = vshrl.u32 %v564, 16
        %v613 = vshrl.u32 %v598, 16
        %v614 = vpack.i.b16 %v613, %v612
        %v618 = vpack.i.b16 %v597, %v563
        %v620 = vshrl.u32 %v563, 16
        %v621 = vshrl.u32 %v597, 16
        %v622 = vpack.i.b16 %v621, %v620
        %v626 = vpack.i.b16 %v599, %v565
        %v628 = vshrl.u32 %v565, 16
        %v629 = vshrl.u32 %v599, 16
        %v630 = vpack.i.b16 %v629, %v628
        %632 = vxpose.xlu0.c.b16.start [1/8] %v602, 128
        %633 = vxpose.xlu0.c.b16.cont [2/8] 0, 128
        %634 = vxpose.xlu0.c.b16.cont [3/8] 0, 128
        %635 = vxpose.xlu0.c.b16.cont [4/8] 0, 128
        %636 = vxpose.xlu0.c.b16.cont [5/8] 0, 128
        %637 = vxpose.xlu0.c.b16.cont [6/8] 0, 128
        %638 = vxpose.xlu0.c.b16.cont [7/8] 0, 128
        %639 = vxpose.xlu0.c.b16.end [8/8] 0, 128
        %v640 = vpop.trf.xlu0
        %v641 = vpop.trf.xlu0
        %v642 = vpop.trf.xlu0
        %v643 = vpop.trf.xlu0
        %v644 = vpop.trf.xlu0
        %v645 = vpop.trf.xlu0
        %v646 = vpop.trf.xlu0
        %v647 = vpop.trf.xlu0
        %648 = vxpose.xlu0.c.b16.start [1/8] %v606, 128
        %649 = vxpose.xlu0.c.b16.cont [2/8] 0, 128
        %650 = vxpose.xlu0.c.b16.cont [3/8] 0, 128
        %651 = vxpose.xlu0.c.b16.cont [4/8] 0, 128
        %652 = vxpose.xlu0.c.b16.cont [5/8] 0, 128
        %653 = vxpose.xlu0.c.b16.cont [6/8] 0, 128
        %654 = vxpose.xlu0.c.b16.cont [7/8] 0, 128
        %655 = vxpose.xlu0.c.b16.end [8/8] 0, 128
        %v656 = vpop.trf.xlu0
        %v657 = vpop.trf.xlu0
        %v658 = vpop.trf.xlu0
        %v659 = vpop.trf.xlu0
        %v660 = vpop.trf.xlu0
        %v661 = vpop.trf.xlu0
        %v662 = vpop.trf.xlu0
        %v663 = vpop.trf.xlu0
        %664 = vxpose.xlu0.c.b16.start [1/8] %v610, 128
        %665 = vxpose.xlu0.c.b16.cont [2/8] 0, 128
        %666 = vxpose.xlu0.c.b16.cont [3/8] 0, 128
        %667 = vxpose.xlu0.c.b16.cont [4/8] 0, 128
        %668 = vxpose.xlu0.c.b16.cont [5/8] 0, 128
        %669 = vxpose.xlu0.c.b16.cont [6/8] 0, 128
        %670 = vxpose.xlu0.c.b16.cont [7/8] 0, 128
        %671 = vxpose.xlu0.c.b16.end [8/8] 0, 128
        %v672 = vpop.trf.xlu0
        %v673 = vpop.trf.xlu0
        %v674 = vpop.trf.xlu0
        %v675 = vpop.trf.xlu0
        %v676 = vpop.trf.xlu0
        %v677 = vpop.trf.xlu0
        %v678 = vpop.trf.xlu0
        %v679 = vpop.trf.xlu0
        %680 = vxpose.xlu0.c.b16.start [1/8] %v614, 128
        %681 = vxpose.xlu0.c.b16.cont [2/8] 0, 128
        %682 = vxpose.xlu0.c.b16.cont [3/8] 0, 128
        %683 = vxpose.xlu0.c.b16.cont [4/8] 0, 128
        %684 = vxpose.xlu0.c.b16.cont [5/8] 0, 128
        %685 = vxpose.xlu0.c.b16.cont [6/8] 0, 128
        %686 = vxpose.xlu0.c.b16.cont [7/8] 0, 128
        %687 = vxpose.xlu0.c.b16.end [8/8] 0, 128
        %v688 = vpop.trf.xlu0
        %v689 = vpop.trf.xlu0
        %v690 = vpop.trf.xlu0
        %v691 = vpop.trf.xlu0
        %v692 = vpop.trf.xlu0
        %v693 = vpop.trf.xlu0
        %v694 = vpop.trf.xlu0
        %v695 = vpop.trf.xlu0
        %696 = vxpose.xlu0.c.b16.start [1/8] %v618, 128
        %697 = vxpose.xlu0.c.b16.cont [2/8] 0, 128
        %698 = vxpose.xlu0.c.b16.cont [3/8] 0, 128
        %699 = vxpose.xlu0.c.b16.cont [4/8] 0, 128
        %700 = vxpose.xlu0.c.b16.cont [5/8] 0, 128
        %701 = vxpose.xlu0.c.b16.cont [6/8] 0, 128
        %702 = vxpose.xlu0.c.b16.cont [7/8] 0, 128
        %703 = vxpose.xlu0.c.b16.end [8/8] 0, 128
        %v704 = vpop.trf.xlu0
        %v705 = vpop.trf.xlu0
        %v706 = vpop.trf.xlu0
        %v707 = vpop.trf.xlu0
        %v708 = vpop.trf.xlu0
        %v709 = vpop.trf.xlu0
        %v710 = vpop.trf.xlu0
        %v711 = vpop.trf.xlu0
        %712 = vxpose.xlu0.c.b16.start [1/8] %v622, 128
        %713 = vxpose.xlu0.c.b16.cont [2/8] 0, 128
        %714 = vxpose.xlu0.c.b16.cont [3/8] 0, 128
        %715 = vxpose.xlu0.c.b16.cont [4/8] 0, 128
        %716 = vxpose.xlu0.c.b16.cont [5/8] 0, 128
        %717 = vxpose.xlu0.c.b16.cont [6/8] 0, 128
        %718 = vxpose.xlu0.c.b16.cont [7/8] 0, 128
        %719 = vxpose.xlu0.c.b16.end [8/8] 0, 128
        %v720 = vpop.trf.xlu0
        %v721 = vpop.trf.xlu0
        %v722 = vpop.trf.xlu0
        %v723 = vpop.trf.xlu0
        %v724 = vpop.trf.xlu0
        %v725 = vpop.trf.xlu0
        %v726 = vpop.trf.xlu0
        %v727 = vpop.trf.xlu0
        %728 = vxpose.xlu0.c.b16.start [1/8] %v626, 128
        %729 = vxpose.xlu0.c.b16.cont [2/8] 0, 128
        %730 = vxpose.xlu0.c.b16.cont [3/8] 0, 128
        %731 = vxpose.xlu0.c.b16.cont [4/8] 0, 128
        %732 = vxpose.xlu0.c.b16.cont [5/8] 0, 128
        %733 = vxpose.xlu0.c.b16.cont [6/8] 0, 128
        %734 = vxpose.xlu0.c.b16.cont [7/8] 0, 128
        %735 = vxpose.xlu0.c.b16.end [8/8] 0, 128
        %v736 = vpop.trf.xlu0
        %v737 = vpop.trf.xlu0
        %v738 = vpop.trf.xlu0
        %v739 = vpop.trf.xlu0
        %v740 = vpop.trf.xlu0
        %v741 = vpop.trf.xlu0
        %v742 = vpop.trf.xlu0
        %v743 = vpop.trf.xlu0
        %744 = vxpose.xlu0.c.b16.start [1/8] %v630, 128
        %745 = vxpose.xlu0.c.b16.cont [2/8] 0, 128
        %746 = vxpose.xlu0.c.b16.cont [3/8] 0, 128
        %747 = vxpose.xlu0.c.b16.cont [4/8] 0, 128
        %748 = vxpose.xlu0.c.b16.cont [5/8] 0, 128
        %749 = vxpose.xlu0.c.b16.cont [6/8] 0, 128
        %750 = vxpose.xlu0.c.b16.cont [7/8] 0, 128
        %751 = vxpose.xlu0.c.b16.end [8/8] 0, 128
        %v752 = vpop.trf.xlu0
        %v753 = vpop.trf.xlu0
        %v754 = vpop.trf.xlu0
        %v755 = vpop.trf.xlu0
        %v756 = vpop.trf.xlu0
        %v757 = vpop.trf.xlu0
        %v758 = vpop.trf.xlu0
        %v759 = vpop.trf.xlu0
        %v760 = vcombine.low %v640, %v704
        %v762 = vunpack.c.l.s4 1983009808
        %v763 = vunpack.c.0.s8 %v762
        %v764 = vlaneseq
        %v765 = vshrl.u32 %v764, 7
        %v766 = vsub.s32 %v763, %v765
        %v767 = vrot.slane %v760, %v766
        %v768 = vcombine.low %v672, %v736
        %v770 = vunpack.c.l.s4 1983009808
        %v771 = vunpack.c.0.s8 %v770
        %v772 = vlaneseq
        %v773 = vshrl.u32 %v772, 7
        %v774 = vsub.s32 %v771, %v773
        %v775 = vrot.slane %v768, %v774
        %v776 = vcombine.low %v767, %v775
        %v778 = vunpack.c.l.s4 1934713408
        %v779 = vunpack.c.0.s8 %v778
        %v780 = vlaneseq
        %v781 = vshrl.u32 %v780, 7
        %v782 = vsub.s32 %v779, %v781
        %v783 = vrot.slane %v776, %v782
        %v784 = vcombine.high %v783, 0
        %v785 = vcombine.low %v656, %v720
        %v787 = vunpack.c.l.s4 1983009808
        %v788 = vunpack.c.0.s8 %v787
        %v789 = vlaneseq
        %v790 = vshrl.u32 %v789, 7
        %v791 = vsub.s32 %v788, %v790
        %v792 = vrot.slane %v785, %v791
        %v793 = vcombine.low %v688, %v752
        %v795 = vunpack.c.l.s4 1983009808
        %v796 = vunpack.c.0.s8 %v795
        %v797 = vlaneseq
        %v798 = vshrl.u32 %v797, 7
        %v799 = vsub.s32 %v796, %v798
        %v800 = vrot.slane %v793, %v799
        %v801 = vcombine.low %v792, %v800
        %v803 = vunpack.c.l.s4 1934713408
        %v804 = vunpack.c.0.s8 %v803
        %v805 = vlaneseq
        %v806 = vshrl.u32 %v805, 7
        %v807 = vsub.s32 %v804, %v806
        %v808 = vrot.slane %v801, %v807
        %v809 = vcombine.high %v808, 0
        %v812 = vpack.i.b16 %v808, %v783
        %v813 = vshrl.u32 %v783, 16
        %v814 = vshrl.u32 %v808, 16
        %v815 = vpack.i.b16 %v814, %v813
        %v818 = vpack.i.b16 %v809, %v784
        %v819 = vshrl.u32 %v784, 16
        %v820 = vshrl.u32 %v809, 16
        %v821 = vpack.i.b16 %v820, %v819
        %vm822 = vcmask 64512
        %v824 = vsel %vm822, %v394, 0
        %vm826 = vcmask 1043456
        %v828 = vsel %vm826, %v812, 0
        %830 = vmatprep.subr.bf16.mxu0 0
        %831 = vmatpush1.bf16.msra.mxu0 %v828
        %832 = vmatprep.subr.bf16.mxu0 0
        %833 = vmatpush1.bf16.msra.mxu0 0
        %834 = vmatprep.subr.bf16.mxu0 0
        %835 = vmatpush1.bf16.msra.mxu0 0
        %836 = vmatprep.subr.bf16.mxu0 0
        %837 = vmatpush1.bf16.msra.mxu0 0
        %838 = vmatprep.subr.bf16.mxu0 0
        %839 = vmatpush1.bf16.msra.mxu0 0
        %840 = vmatprep.subr.bf16.mxu0 0
        %841 = vmatpush1.bf16.msra.mxu0 0
        %842 = vmatprep.subr.bf16.mxu0 0
        %843 = vmatpush1.bf16.msra.mxu0 0
        %844 = vmatprep.subr.bf16.mxu0 0
        %845 = vmatpush1.bf16.msra.mxu0 0
        %846 = vmatprep.subr.bf16.mxu0 0
        %847 = vmatpush1.bf16.msra.mxu0 0
        %848 = vmatprep.subr.bf16.mxu0 0
        %849 = vmatpush1.bf16.msra.mxu0 0
        %850 = vmatprep.subr.bf16.mxu0 0
        %851 = vmatpush1.bf16.msra.mxu0 0
        %852 = vmatprep.subr.bf16.mxu0 0
        %853 = vmatpush1.bf16.msra.mxu0 0
        %854 = vmatprep.subr.bf16.mxu0 0
        %855 = vmatpush1.bf16.msra.mxu0 0
        %856 = vmatprep.subr.bf16.mxu0 0
        %857 = vmatpush1.bf16.msra.mxu0 0
        %858 = vmatprep.subr.bf16.mxu0 0
        %859 = vmatpush1.bf16.msra.mxu0 0
        %860 = vmatprep.subr.bf16.mxu0 0
        %861 = vmatpush1.bf16.msra.mxu0 0
        %862 = vmatprep.mubr.bf16.mxu0 0
        %863 = vmatmul.mubr.bf16.gmra.mrb[0].mxu0 %v824
        %v864 = vpop.f32.mrb[0].mxu0
        %v865 = vadd.f32 0.0, %v864
        %v866 = vpop.f32.mrb[0].mxu0
        %v867 = vpop.f32.mrb[0].mxu0
        %v868 = vpop.f32.mrb[0].mxu0
        %869 = vdwg.mxu0
        %v871 = vsel %vm822, %v397, 0
        %v874 = vsel %vm826, %v815, 0
        %876 = vmatprep.subr.bf16.mxu0 0
        %877 = vmatpush1.bf16.msra.mxu0 %v874
        %878 = vmatprep.subr.bf16.mxu0 0
        %879 = vmatpush1.bf16.msra.mxu0 0
        %880 = vmatprep.subr.bf16.mxu0 0
        %881 = vmatpush1.bf16.msra.mxu0 0
        %882 = vmatprep.subr.bf16.mxu0 0
        %883 = vmatpush1.bf16.msra.mxu0 0
        %884 = vmatprep.subr.bf16.mxu0 0
        %885 = vmatpush1.bf16.msra.mxu0 0
        %886 = vmatprep.subr.bf16.mxu0 0
        %887 = vmatpush1.bf16.msra.mxu0 0
        %888 = vmatprep.subr.bf16.mxu0 0
        %889 = vmatpush1.bf16.msra.mxu0 0
        %890 = vmatprep.subr.bf16.mxu0 0
        %891 = vmatpush1.bf16.msra.mxu0 0
        %892 = vmatprep.subr.bf16.mxu0 0
        %893 = vmatpush1.bf16.msra.mxu0 0
        %894 = vmatprep.subr.bf16.mxu0 0
        %895 = vmatpush1.bf16.msra.mxu0 0
        %896 = vmatprep.subr.bf16.mxu0 0
        %897 = vmatpush1.bf16.msra.mxu0 0
        %898 = vmatprep.subr.bf16.mxu0 0
        %899 = vmatpush1.bf16.msra.mxu0 0
        %900 = vmatprep.subr.bf16.mxu0 0
        %901 = vmatpush1.bf16.msra.mxu0 0
        %902 = vmatprep.subr.bf16.mxu0 0
        %903 = vmatpush1.bf16.msra.mxu0 0
        %904 = vmatprep.subr.bf16.mxu0 0
        %905 = vmatpush1.bf16.msra.mxu0 0
        %906 = vmatprep.subr.bf16.mxu0 0
        %907 = vmatpush1.bf16.msra.mxu0 0
        %908 = vmatprep.mubr.bf16.mxu0 0
        %909 = vmatmul.mubr.bf16.gmra.mrb[0].mxu0 %v871
        %v910 = vpop.f32.mrb[0].mxu0
        %v911 = vadd.f32 0.0, %v910
        %v912 = vpop.f32.mrb[0].mxu0
        %v913 = vpop.f32.mrb[0].mxu0
        %v914 = vpop.f32.mrb[0].mxu0
        %915 = vdwg.mxu0
        %v917 = vsel %vm822, %v400, 0
        %v920 = vsel %vm826, %v818, 0
        %922 = vmatprep.subr.bf16.mxu0 0
        %923 = vmatpush1.bf16.msra.mxu0 %v920
        %924 = vmatprep.subr.bf16.mxu0 0
        %925 = vmatpush1.bf16.msra.mxu0 0
        %926 = vmatprep.subr.bf16.mxu0 0
        %927 = vmatpush1.bf16.msra.mxu0 0
        %928 = vmatprep.subr.bf16.mxu0 0
        %929 = vmatpush1.bf16.msra.mxu0 0
        %930 = vmatprep.subr.bf16.mxu0 0
        %931 = vmatpush1.bf16.msra.mxu0 0
        %932 = vmatprep.subr.bf16.mxu0 0
        %933 = vmatpush1.bf16.msra.mxu0 0
        %934 = vmatprep.subr.bf16.mxu0 0
        %935 = vmatpush1.bf16.msra.mxu0 0
        %936 = vmatprep.subr.bf16.mxu0 0
        %937 = vmatpush1.bf16.msra.mxu0 0
        %938 = vmatprep.subr.bf16.mxu0 0
        %939 = vmatpush1.bf16.msra.mxu0 0
        %940 = vmatprep.subr.bf16.mxu0 0
        %941 = vmatpush1.bf16.msra.mxu0 0
        %942 = vmatprep.subr.bf16.mxu0 0
        %943 = vmatpush1.bf16.msra.mxu0 0
        %944 = vmatprep.subr.bf16.mxu0 0
        %945 = vmatpush1.bf16.msra.mxu0 0
        %946 = vmatprep.subr.bf16.mxu0 0
        %947 = vmatpush1.bf16.msra.mxu0 0
        %948 = vmatprep.subr.bf16.mxu0 0
        %949 = vmatpush1.bf16.msra.mxu0 0
        %950 = vmatprep.subr.bf16.mxu0 0
        %951 = vmatpush1.bf16.msra.mxu0 0
        %952 = vmatprep.subr.bf16.mxu0 0
        %953 = vmatpush1.bf16.msra.mxu0 0
        %954 = vmatprep.mubr.bf16.mxu0 0
        %955 = vmatmul.mubr.bf16.gmra.mrb[0].mxu0 %v917
        %v956 = vpop.f32.mrb[0].mxu0
        %v957 = vadd.f32 0.0, %v956
        %v958 = vpop.f32.mrb[0].mxu0
        %v959 = vpop.f32.mrb[0].mxu0
        %v960 = vpop.f32.mrb[0].mxu0
        %961 = vdwg.mxu0
        %v963 = vsel %vm822, %v403, 0
        %v966 = vsel %vm826, %v821, 0
        %968 = vmatprep.subr.bf16.mxu0 0
        %969 = vmatpush1.bf16.msra.mxu0 %v966
        %970 = vmatprep.subr.bf16.mxu0 0
        %971 = vmatpush1.bf16.msra.mxu0 0
        %972 = vmatprep.subr.bf16.mxu0 0
        %973 = vmatpush1.bf16.msra.mxu0 0
        %974 = vmatprep.subr.bf16.mxu0 0
        %975 = vmatpush1.bf16.msra.mxu0 0
        %976 = vmatprep.subr.bf16.mxu0 0
        %977 = vmatpush1.bf16.msra.mxu0 0
        %978 = vmatprep.subr.bf16.mxu0 0
        %979 = vmatpush1.bf16.msra.mxu0 0
        %980 = vmatprep.subr.bf16.mxu0 0
        %981 = vmatpush1.bf16.msra.mxu0 0
        %982 = vmatprep.subr.bf16.mxu0 0
        %983 = vmatpush1.bf16.msra.mxu0 0
        %984 = vmatprep.subr.bf16.mxu0 0
        %985 = vmatpush1.bf16.msra.mxu0 0
        %986 = vmatprep.subr.bf16.mxu0 0
        %987 = vmatpush1.bf16.msra.mxu0 0
        %988 = vmatprep.subr.bf16.mxu0 0
        %989 = vmatpush1.bf16.msra.mxu0 0
        %990 = vmatprep.subr.bf16.mxu0 0
        %991 = vmatpush1.bf16.msra.mxu0 0
        %992 = vmatprep.subr.bf16.mxu0 0
        %993 = vmatpush1.bf16.msra.mxu0 0
        %994 = vmatprep.subr.bf16.mxu0 0
        %995 = vmatpush1.bf16.msra.mxu0 0
        %996 = vmatprep.subr.bf16.mxu0 0
        %997 = vmatpush1.bf16.msra.mxu0 0
        %998 = vmatprep.subr.bf16.mxu0 0
        %999 = vmatpush1.bf16.msra.mxu0 0
        %1000 = vmatprep.mubr.bf16.mxu0 0
        %1001 = vmatmul.mubr.bf16.gmra.mrb[0].mxu0 %v963
        %v1002 = vpop.f32.mrb[0].mxu0
        %v1003 = vadd.f32 0.0, %v1002
        %v1004 = vpop.f32.mrb[0].mxu0
        %v1005 = vpop.f32.mrb[0].mxu0
        %v1006 = vpop.f32.mrb[0].mxu0
        %1007 = vdwg.mxu0
        %v1008 = vmul.f32 %v865, 0.35355338
        %v1009 = vmul.f32 %v911, 0.35355338
        %v1010 = vmul.f32 %v957, 0.35355338
        %v1011 = vmul.f32 %v1003, 0.35355338
        %v1012 = vsel %vm822, %v1008, -inf
        %1013 = vmax.xlane.f32.xlu0 %v1012
        %v1014 = vpop.xlane.xlu0 %1013
        %v1015 = vsel %vm822, %v1009, -inf
        %1016 = vmax.xlane.f32.xlu0 %v1015
        %v1017 = vpop.xlane.xlu0 %1016
        %v1018 = vsel %vm822, %v1010, -inf
        %1019 = vmax.xlane.f32.xlu0 %v1018
        %v1020 = vpop.xlane.xlu0 %1019
        %v1021 = vsel %vm822, %v1011, -inf
        %1022 = vmax.xlane.f32.xlu0 %v1021
        %v1023 = vpop.xlane.xlu0 %1022
        %v1024 = vsub.f32 %v1008, %v1014
        %v1025 = vsub.f32 %v1009, %v1017
        %v1026 = vsub.f32 %v1010, %v1020
        %v1027 = vsub.f32 %v1011, %v1023
        %v1028 = vmul.f32 %v1024, 1.442695
        %v1029 = vpow.pop %v1028
        %v1030 = vmul.f32 %v1025, 1.442695
        %v1031 = vpow.pop %v1030
        %v1032 = vmul.f32 %v1026, 1.442695
        %v1033 = vpow.pop %v1032
        %v1034 = vmul.f32 %v1027, 1.442695
        %v1035 = vpow.pop %v1034
        %v1036 = vsel %vm822, %v1029, 0.0
        %1037 = vadd.xlane.f32.xlu0 %v1036
        %v1038 = vpop.xlane.xlu0 %1037
        %v1039 = vsel %vm822, %v1031, 0.0
        %1040 = vadd.xlane.f32.xlu0 %v1039
        %v1041 = vpop.xlane.xlu0 %1040
        %v1042 = vsel %vm822, %v1033, 0.0
        %1043 = vadd.xlane.f32.xlu0 %v1042
        %v1044 = vpop.xlane.xlu0 %1043
        %v1045 = vsel %vm822, %v1035, 0.0
        %1046 = vadd.xlane.f32.xlu0 %v1045
        %v1047 = vpop.xlane.xlu0 %1046
        %v1048 = vrcp.pop %v1038
        %v1049 = vrcp.pop %v1041
        %v1050 = vrcp.pop %v1044
        %v1051 = vrcp.pop %v1047
        %v1052 = vmul.f32 %v1029, %v1048
        %v1053 = vmul.f32 %v1031, %v1049
        %v1054 = vmul.f32 %v1033, %v1050
        %v1055 = vmul.f32 %v1035, %v1051
        %v1056 = vpack.c.bf16 %v1052, %v1052
        %v1057 = vpack.c.bf16 %v1053, %v1053
        %v1058 = vpack.c.bf16 %v1054, %v1054
        %v1059 = vpack.c.bf16 %v1055, %v1055
        %1060 = vxpose.xlu0.c.b16.start [1/8] %v334, 128
        %1061 = vxpose.xlu0.c.b16.cont [2/8] 0, 128
        %1062 = vxpose.xlu0.c.b16.cont [3/8] 0, 128
        %1063 = vxpose.xlu0.c.b16.cont [4/8] 0, 128
        %1064 = vxpose.xlu0.c.b16.cont [5/8] 0, 128
        %1065 = vxpose.xlu0.c.b16.cont [6/8] 0, 128
        %1066 = vxpose.xlu0.c.b16.cont [7/8] 0, 128
        %1067 = vxpose.xlu0.c.b16.end [8/8] 0, 128
        %v1068 = vpop.trf.xlu0
        %v1069 = vpop.trf.xlu0
        %v1070 = vpop.trf.xlu0
        %v1071 = vpop.trf.xlu0
        %v1072 = vpop.trf.xlu0
        %v1073 = vpop.trf.xlu0
        %v1074 = vpop.trf.xlu0
        %v1075 = vpop.trf.xlu0
        %1076 = vxpose.xlu0.c.b16.start [1/8] %v335, 128
        %1077 = vxpose.xlu0.c.b16.cont [2/8] 0, 128
        %1078 = vxpose.xlu0.c.b16.cont [3/8] 0, 128
        %1079 = vxpose.xlu0.c.b16.cont [4/8] 0, 128
        %1080 = vxpose.xlu0.c.b16.cont [5/8] 0, 128
        %1081 = vxpose.xlu0.c.b16.cont [6/8] 0, 128
        %1082 = vxpose.xlu0.c.b16.cont [7/8] 0, 128
        %1083 = vxpose.xlu0.c.b16.end [8/8] 0, 128
        %v1084 = vpop.trf.xlu0
        %v1085 = vpop.trf.xlu0
        %v1086 = vpop.trf.xlu0
        %v1087 = vpop.trf.xlu0
        %v1088 = vpop.trf.xlu0
        %v1089 = vpop.trf.xlu0
        %v1090 = vpop.trf.xlu0
        %v1091 = vpop.trf.xlu0
        %1092 = vxpose.xlu0.c.b16.start [1/8] %v336, 128
        %1093 = vxpose.xlu0.c.b16.cont [2/8] 0, 128
        %1094 = vxpose.xlu0.c.b16.cont [3/8] 0, 128
        %1095 = vxpose.xlu0.c.b16.cont [4/8] 0, 128
        %1096 = vxpose.xlu0.c.b16.cont [5/8] 0, 128
        %1097 = vxpose.xlu0.c.b16.cont [6/8] 0, 128
        %1098 = vxpose.xlu0.c.b16.cont [7/8] 0, 128
        %1099 = vxpose.xlu0.c.b16.end [8/8] 0, 128
        %v1100 = vpop.trf.xlu0
        %v1101 = vpop.trf.xlu0
        %v1102 = vpop.trf.xlu0
        %v1103 = vpop.trf.xlu0
        %v1104 = vpop.trf.xlu0
        %v1105 = vpop.trf.xlu0
        %v1106 = vpop.trf.xlu0
        %v1107 = vpop.trf.xlu0
        %1108 = vxpose.xlu0.c.b16.start [1/8] %v337, 128
        %1109 = vxpose.xlu0.c.b16.cont [2/8] 0, 128
        %1110 = vxpose.xlu0.c.b16.cont [3/8] 0, 128
        %1111 = vxpose.xlu0.c.b16.cont [4/8] 0, 128
        %1112 = vxpose.xlu0.c.b16.cont [5/8] 0, 128
        %1113 = vxpose.xlu0.c.b16.cont [6/8] 0, 128
        %1114 = vxpose.xlu0.c.b16.cont [7/8] 0, 128
        %1115 = vxpose.xlu0.c.b16.end [8/8] 0, 128
        %v1116 = vpop.trf.xlu0
        %v1117 = vpop.trf.xlu0
        %v1118 = vpop.trf.xlu0
        %v1119 = vpop.trf.xlu0
        %v1120 = vpop.trf.xlu0
        %v1121 = vpop.trf.xlu0
        %v1122 = vpop.trf.xlu0
        %v1123 = vpop.trf.xlu0
        %1124 = vxpose.xlu0.c.b16.start [1/8] %v338, 128
        %1125 = vxpose.xlu0.c.b16.cont [2/8] 0, 128
        %1126 = vxpose.xlu0.c.b16.cont [3/8] 0, 128
        %1127 = vxpose.xlu0.c.b16.cont [4/8] 0, 128
        %1128 = vxpose.xlu0.c.b16.cont [5/8] 0, 128
        %1129 = vxpose.xlu0.c.b16.cont [6/8] 0, 128
        %1130 = vxpose.xlu0.c.b16.cont [7/8] 0, 128
        %1131 = vxpose.xlu0.c.b16.end [8/8] 0, 128
        %v1132 = vpop.trf.xlu0
        %v1133 = vpop.trf.xlu0
        %v1134 = vpop.trf.xlu0
        %v1135 = vpop.trf.xlu0
        %v1136 = vpop.trf.xlu0
        %v1137 = vpop.trf.xlu0
        %v1138 = vpop.trf.xlu0
        %v1139 = vpop.trf.xlu0
        %1140 = vxpose.xlu0.c.b16.start [1/8] %v339, 128
        %1141 = vxpose.xlu0.c.b16.cont [2/8] 0, 128
        %1142 = vxpose.xlu0.c.b16.cont [3/8] 0, 128
        %1143 = vxpose.xlu0.c.b16.cont [4/8] 0, 128
        %1144 = vxpose.xlu0.c.b16.cont [5/8] 0, 128
        %1145 = vxpose.xlu0.c.b16.cont [6/8] 0, 128
        %1146 = vxpose.xlu0.c.b16.cont [7/8] 0, 128
        %1147 = vxpose.xlu0.c.b16.end [8/8] 0, 128
        %v1148 = vpop.trf.xlu0
        %v1149 = vpop.trf.xlu0
        %v1150 = vpop.trf.xlu0
        %v1151 = vpop.trf.xlu0
        %v1152 = vpop.trf.xlu0
        %v1153 = vpop.trf.xlu0
        %v1154 = vpop.trf.xlu0
        %v1155 = vpop.trf.xlu0
        %1156 = vxpose.xlu0.c.b16.start [1/8] %v340, 128
        %1157 = vxpose.xlu0.c.b16.cont [2/8] 0, 128
        %1158 = vxpose.xlu0.c.b16.cont [3/8] 0, 128
        %1159 = vxpose.xlu0.c.b16.cont [4/8] 0, 128
        %1160 = vxpose.xlu0.c.b16.cont [5/8] 0, 128
        %1161 = vxpose.xlu0.c.b16.cont [6/8] 0, 128
        %1162 = vxpose.xlu0.c.b16.cont [7/8] 0, 128
        %1163 = vxpose.xlu0.c.b16.end [8/8] 0, 128
        %v1164 = vpop.trf.xlu0
        %v1165 = vpop.trf.xlu0
        %v1166 = vpop.trf.xlu0
        %v1167 = vpop.trf.xlu0
        %v1168 = vpop.trf.xlu0
        %v1169 = vpop.trf.xlu0
        %v1170 = vpop.trf.xlu0
        %v1171 = vpop.trf.xlu0
        %1172 = vxpose.xlu0.c.b16.start [1/8] %v341, 128
        %1173 = vxpose.xlu0.c.b16.cont [2/8] 0, 128
        %1174 = vxpose.xlu0.c.b16.cont [3/8] 0, 128
        %1175 = vxpose.xlu0.c.b16.cont [4/8] 0, 128
        %1176 = vxpose.xlu0.c.b16.cont [5/8] 0, 128
        %1177 = vxpose.xlu0.c.b16.cont [6/8] 0, 128
        %1178 = vxpose.xlu0.c.b16.cont [7/8] 0, 128
        %1179 = vxpose.xlu0.c.b16.end [8/8] 0, 128
        %v1180 = vpop.trf.xlu0
        %v1181 = vpop.trf.xlu0
        %v1182 = vpop.trf.xlu0
        %v1183 = vpop.trf.xlu0
        %v1184 = vpop.trf.xlu0
        %v1185 = vpop.trf.xlu0
        %v1186 = vpop.trf.xlu0
        %v1187 = vpop.trf.xlu0
        %v1188 = vcombine.low %v1068, %v1132
        %v1190 = vunpack.c.l.s4 1983009808
        %v1191 = vunpack.c.0.s8 %v1190
        %v1192 = vlaneseq
        %v1193 = vshrl.u32 %v1192, 7
        %v1194 = vsub.s32 %v1191, %v1193
        %v1195 = vrot.slane %v1188, %v1194
        %v1196 = vcombine.low %v1100, %v1164
        %v1198 = vunpack.c.l.s4 1983009808
        %v1199 = vunpack.c.0.s8 %v1198
        %v1200 = vlaneseq
        %v1201 = vshrl.u32 %v1200, 7
        %v1202 = vsub.s32 %v1199, %v1201
        %v1203 = vrot.slane %v1196, %v1202
        %v1204 = vcombine.low %v1195, %v1203
        %v1205 = vcombine.high %v1195, %v1203
        %v1207 = vunpack.c.l.s4 1934713408
        %v1208 = vunpack.c.0.s8 %v1207
        %v1209 = vlaneseq
        %v1210 = vshrl.u32 %v1209, 7
        %v1211 = vsub.s32 %v1208, %v1210
        %v1212 = vrot.slane %v1204, %v1211
        %v1214 = vunpack.c.l.s4 1934713408
        %v1215 = vunpack.c.0.s8 %v1214
        %v1216 = vlaneseq
        %v1217 = vshrl.u32 %v1216, 7
        %v1218 = vsub.s32 %v1215, %v1217
        %v1219 = vrot.slane %v1205, %v1218
        %v1220 = vcombine.high %v1212, 0
        %v1221 = vcombine.high %v1219, 0
        %v1222 = vcombine.low %v1084, %v1148
        %v1224 = vunpack.c.l.s4 1983009808
        %v1225 = vunpack.c.0.s8 %v1224
        %v1226 = vlaneseq
        %v1227 = vshrl.u32 %v1226, 7
        %v1228 = vsub.s32 %v1225, %v1227
        %v1229 = vrot.slane %v1222, %v1228
        %v1230 = vcombine.low %v1116, %v1180
        %v1232 = vunpack.c.l.s4 1983009808
        %v1233 = vunpack.c.0.s8 %v1232
        %v1234 = vlaneseq
        %v1235 = vshrl.u32 %v1234, 7
        %v1236 = vsub.s32 %v1233, %v1235
        %v1237 = vrot.slane %v1230, %v1236
        %v1238 = vcombine.low %v1229, %v1237
        %v1239 = vcombine.high %v1229, %v1237
        %v1241 = vunpack.c.l.s4 1934713408
        %v1242 = vunpack.c.0.s8 %v1241
        %v1243 = vlaneseq
        %v1244 = vshrl.u32 %v1243, 7
        %v1245 = vsub.s32 %v1242, %v1244
        %v1246 = vrot.slane %v1238, %v1245
        %v1248 = vunpack.c.l.s4 1934713408
        %v1249 = vunpack.c.0.s8 %v1248
        %v1250 = vlaneseq
        %v1251 = vshrl.u32 %v1250, 7
        %v1252 = vsub.s32 %v1249, %v1251
        %v1253 = vrot.slane %v1239, %v1252
        %v1254 = vcombine.high %v1246, 0
        %v1255 = vcombine.high %v1253, 0
        %v1258 = vpack.i.b16 %v1246, %v1212
        %v1260 = vshrl.u32 %v1212, 16
        %v1261 = vshrl.u32 %v1246, 16
        %v1262 = vpack.i.b16 %v1261, %v1260
        %v1266 = vpack.i.b16 %v1254, %v1220
        %v1268 = vshrl.u32 %v1220, 16
        %v1269 = vshrl.u32 %v1254, 16
        %v1270 = vpack.i.b16 %v1269, %v1268
        %v1274 = vpack.i.b16 %v1253, %v1219
        %v1276 = vshrl.u32 %v1219, 16
        %v1277 = vshrl.u32 %v1253, 16
        %v1278 = vpack.i.b16 %v1277, %v1276
        %v1282 = vpack.i.b16 %v1255, %v1221
        %v1284 = vshrl.u32 %v1221, 16
        %v1285 = vshrl.u32 %v1255, 16
        %v1286 = vpack.i.b16 %v1285, %v1284
        %1288 = vxpose.xlu0.c.b16.start [1/8] %v1258, 128
        %1289 = vxpose.xlu0.c.b16.cont [2/8] 0, 128
        %1290 = vxpose.xlu0.c.b16.cont [3/8] 0, 128
        %1291 = vxpose.xlu0.c.b16.cont [4/8] 0, 128
        %1292 = vxpose.xlu0.c.b16.cont [5/8] 0, 128
        %1293 = vxpose.xlu0.c.b16.cont [6/8] 0, 128
        %1294 = vxpose.xlu0.c.b16.cont [7/8] 0, 128
        %1295 = vxpose.xlu0.c.b16.end [8/8] 0, 128
        %v1296 = vpop.trf.xlu0
        %v1297 = vpop.trf.xlu0
        %v1298 = vpop.trf.xlu0
        %v1299 = vpop.trf.xlu0
        %v1300 = vpop.trf.xlu0
        %v1301 = vpop.trf.xlu0
        %v1302 = vpop.trf.xlu0
        %v1303 = vpop.trf.xlu0
        %1304 = vxpose.xlu0.c.b16.start [1/8] %v1262, 128
        %1305 = vxpose.xlu0.c.b16.cont [2/8] 0, 128
        %1306 = vxpose.xlu0.c.b16.cont [3/8] 0, 128
        %1307 = vxpose.xlu0.c.b16.cont [4/8] 0, 128
        %1308 = vxpose.xlu0.c.b16.cont [5/8] 0, 128
        %1309 = vxpose.xlu0.c.b16.cont [6/8] 0, 128
        %1310 = vxpose.xlu0.c.b16.cont [7/8] 0, 128
        %1311 = vxpose.xlu0.c.b16.end [8/8] 0, 128
        %v1312 = vpop.trf.xlu0
        %v1313 = vpop.trf.xlu0
        %v1314 = vpop.trf.xlu0
        %v1315 = vpop.trf.xlu0
        %v1316 = vpop.trf.xlu0
        %v1317 = vpop.trf.xlu0
        %v1318 = vpop.trf.xlu0
        %v1319 = vpop.trf.xlu0
        %1320 = vxpose.xlu0.c.b16.start [1/8] %v1266, 128
        %1321 = vxpose.xlu0.c.b16.cont [2/8] 0, 128
        %1322 = vxpose.xlu0.c.b16.cont [3/8] 0, 128
        %1323 = vxpose.xlu0.c.b16.cont [4/8] 0, 128
        %1324 = vxpose.xlu0.c.b16.cont [5/8] 0, 128
        %1325 = vxpose.xlu0.c.b16.cont [6/8] 0, 128
        %1326 = vxpose.xlu0.c.b16.cont [7/8] 0, 128
        %1327 = vxpose.xlu0.c.b16.end [8/8] 0, 128
        %v1328 = vpop.trf.xlu0
        %v1329 = vpop.trf.xlu0
        %v1330 = vpop.trf.xlu0
        %v1331 = vpop.trf.xlu0
        %v1332 = vpop.trf.xlu0
        %v1333 = vpop.trf.xlu0
        %v1334 = vpop.trf.xlu0
        %v1335 = vpop.trf.xlu0
        %1336 = vxpose.xlu0.c.b16.start [1/8] %v1270, 128
        %1337 = vxpose.xlu0.c.b16.cont [2/8] 0, 128
        %1338 = vxpose.xlu0.c.b16.cont [3/8] 0, 128
        %1339 = vxpose.xlu0.c.b16.cont [4/8] 0, 128
        %1340 = vxpose.xlu0.c.b16.cont [5/8] 0, 128
        %1341 = vxpose.xlu0.c.b16.cont [6/8] 0, 128
        %1342 = vxpose.xlu0.c.b16.cont [7/8] 0, 128
        %1343 = vxpose.xlu0.c.b16.end [8/8] 0, 128
        %v1344 = vpop.trf.xlu0
        %v1345 = vpop.trf.xlu0
        %v1346 = vpop.trf.xlu0
        %v1347 = vpop.trf.xlu0
        %v1348 = vpop.trf.xlu0
        %v1349 = vpop.trf.xlu0
        %v1350 = vpop.trf.xlu0
        %v1351 = vpop.trf.xlu0
        %1352 = vxpose.xlu0.c.b16.start [1/8] %v1274, 128
        %1353 = vxpose.xlu0.c.b16.cont [2/8] 0, 128
        %1354 = vxpose.xlu0.c.b16.cont [3/8] 0, 128
        %1355 = vxpose.xlu0.c.b16.cont [4/8] 0, 128
        %1356 = vxpose.xlu0.c.b16.cont [5/8] 0, 128
        %1357 = vxpose.xlu0.c.b16.cont [6/8] 0, 128
        %1358 = vxpose.xlu0.c.b16.cont [7/8] 0, 128
        %1359 = vxpose.xlu0.c.b16.end [8/8] 0, 128
        %v1360 = vpop.trf.xlu0
        %v1361 = vpop.trf.xlu0
        %v1362 = vpop.trf.xlu0
        %v1363 = vpop.trf.xlu0
        %v1364 = vpop.trf.xlu0
        %v1365 = vpop.trf.xlu0
        %v1366 = vpop.trf.xlu0
        %v1367 = vpop.trf.xlu0
        %1368 = vxpose.xlu0.c.b16.start [1/8] %v1278, 128
        %1369 = vxpose.xlu0.c.b16.cont [2/8] 0, 128
        %1370 = vxpose.xlu0.c.b16.cont [3/8] 0, 128
        %1371 = vxpose.xlu0.c.b16.cont [4/8] 0, 128
        %1372 = vxpose.xlu0.c.b16.cont [5/8] 0, 128
        %1373 = vxpose.xlu0.c.b16.cont [6/8] 0, 128
        %1374 = vxpose.xlu0.c.b16.cont [7/8] 0, 128
        %1375 = vxpose.xlu0.c.b16.end [8/8] 0, 128
        %v1376 = vpop.trf.xlu0
        %v1377 = vpop.trf.xlu0
        %v1378 = vpop.trf.xlu0
        %v1379 = vpop.trf.xlu0
        %v1380 = vpop.trf.xlu0
        %v1381 = vpop.trf.xlu0
        %v1382 = vpop.trf.xlu0
        %v1383 = vpop.trf.xlu0
        %1384 = vxpose.xlu0.c.b16.start [1/8] %v1282, 128
        %1385 = vxpose.xlu0.c.b16.cont [2/8] 0, 128
        %1386 = vxpose.xlu0.c.b16.cont [3/8] 0, 128
        %1387 = vxpose.xlu0.c.b16.cont [4/8] 0, 128
        %1388 = vxpose.xlu0.c.b16.cont [5/8] 0, 128
        %1389 = vxpose.xlu0.c.b16.cont [6/8] 0, 128
        %1390 = vxpose.xlu0.c.b16.cont [7/8] 0, 128
        %1391 = vxpose.xlu0.c.b16.end [8/8] 0, 128
        %v1392 = vpop.trf.xlu0
        %v1393 = vpop.trf.xlu0
        %v1394 = vpop.trf.xlu0
        %v1395 = vpop.trf.xlu0
        %v1396 = vpop.trf.xlu0
        %v1397 = vpop.trf.xlu0
        %v1398 = vpop.trf.xlu0
        %v1399 = vpop.trf.xlu0
        %1400 = vxpose.xlu0.c.b16.start [1/8] %v1286, 128
        %1401 = vxpose.xlu0.c.b16.cont [2/8] 0, 128
        %1402 = vxpose.xlu0.c.b16.cont [3/8] 0, 128
        %1403 = vxpose.xlu0.c.b16.cont [4/8] 0, 128
        %1404 = vxpose.xlu0.c.b16.cont [5/8] 0, 128
        %1405 = vxpose.xlu0.c.b16.cont [6/8] 0, 128
        %1406 = vxpose.xlu0.c.b16.cont [7/8] 0, 128
        %1407 = vxpose.xlu0.c.b16.end [8/8] 0, 128
        %v1408 = vpop.trf.xlu0
        %v1409 = vpop.trf.xlu0
        %v1410 = vpop.trf.xlu0
        %v1411 = vpop.trf.xlu0
        %v1412 = vpop.trf.xlu0
        %v1413 = vpop.trf.xlu0
        %v1414 = vpop.trf.xlu0
        %v1415 = vpop.trf.xlu0
        %v1416 = vcombine.low %v1296, %v1360
        %v1418 = vunpack.c.l.s4 1983009808
        %v1419 = vunpack.c.0.s8 %v1418
        %v1420 = vlaneseq
        %v1421 = vshrl.u32 %v1420, 7
        %v1422 = vsub.s32 %v1419, %v1421
        %v1423 = vrot.slane %v1416, %v1422
        %v1424 = vcombine.low %v1328, %v1392
        %v1426 = vunpack.c.l.s4 1983009808
        %v1427 = vunpack.c.0.s8 %v1426
        %v1428 = vlaneseq
        %v1429 = vshrl.u32 %v1428, 7
        %v1430 = vsub.s32 %v1427, %v1429
        %v1431 = vrot.slane %v1424, %v1430
        %v1432 = vcombine.low %v1423, %v1431
        %v1434 = vunpack.c.l.s4 1934713408
        %v1435 = vunpack.c.0.s8 %v1434
        %v1436 = vlaneseq
        %v1437 = vshrl.u32 %v1436, 7
        %v1438 = vsub.s32 %v1435, %v1437
        %v1439 = vrot.slane %v1432, %v1438
        %v1440 = vcombine.high %v1439, 0
        %v1441 = vcombine.low %v1312, %v1376
        %v1443 = vunpack.c.l.s4 1983009808
        %v1444 = vunpack.c.0.s8 %v1443
        %v1445 = vlaneseq
        %v1446 = vshrl.u32 %v1445, 7
        %v1447 = vsub.s32 %v1444, %v1446
        %v1448 = vrot.slane %v1441, %v1447
        %v1449 = vcombine.low %v1344, %v1408
        %v1451 = vunpack.c.l.s4 1983009808
        %v1452 = vunpack.c.0.s8 %v1451
        %v1453 = vlaneseq
        %v1454 = vshrl.u32 %v1453, 7
        %v1455 = vsub.s32 %v1452, %v1454
        %v1456 = vrot.slane %v1449, %v1455
        %v1457 = vcombine.low %v1448, %v1456
        %v1459 = vunpack.c.l.s4 1934713408
        %v1460 = vunpack.c.0.s8 %v1459
        %v1461 = vlaneseq
        %v1462 = vshrl.u32 %v1461, 7
        %v1463 = vsub.s32 %v1460, %v1462
        %v1464 = vrot.slane %v1457, %v1463
        %v1465 = vcombine.high %v1464, 0
        %v1468 = vpack.i.b16 %v1464, %v1439
        %v1469 = vshrl.u32 %v1439, 16
        %v1470 = vshrl.u32 %v1464, 16
        %v1471 = vpack.i.b16 %v1470, %v1469
        %v1474 = vpack.i.b16 %v1465, %v1440
        %v1475 = vshrl.u32 %v1440, 16
        %v1476 = vshrl.u32 %v1465, 16
        %v1477 = vpack.i.b16 %v1476, %v1475
        %v1479 = vsel %vm822, %v1468, 0
        %v1482 = vsel %vm822, %v1056, 0
        %1484 = vmatprep.subr.bf16.mxu0 0
        %1485 = vmatpush1.bf16.xpose.msra.mxu0 %v1482
        %1486 = vmatprep.subr.bf16.mxu0 0
        %1487 = vmatpush1.bf16.xpose.msra.mxu0 0
        %1488 = vmatprep.subr.bf16.mxu0 0
        %1489 = vmatpush1.bf16.xpose.msra.mxu0 0
        %1490 = vmatprep.subr.bf16.mxu0 0
        %1491 = vmatpush1.bf16.xpose.msra.mxu0 0
        %1492 = vmatprep.subr.bf16.mxu0 0
        %1493 = vmatpush1.bf16.xpose.msra.mxu0 0
        %1494 = vmatprep.subr.bf16.mxu0 0
        %1495 = vmatpush1.bf16.xpose.msra.mxu0 0
        %1496 = vmatprep.subr.bf16.mxu0 0
        %1497 = vmatpush1.bf16.xpose.msra.mxu0 0
        %1498 = vmatprep.subr.bf16.mxu0 0
        %1499 = vmatpush1.bf16.xpose.msra.mxu0 0
        %1500 = vmatprep.subr.bf16.mxu0 0
        %1501 = vmatpush1.bf16.xpose.msra.mxu0 0
        %1502 = vmatprep.subr.bf16.mxu0 0
        %1503 = vmatpush1.bf16.xpose.msra.mxu0 0
        %1504 = vmatprep.subr.bf16.mxu0 0
        %1505 = vmatpush1.bf16.xpose.msra.mxu0 0
        %1506 = vmatprep.subr.bf16.mxu0 0
        %1507 = vmatpush1.bf16.xpose.msra.mxu0 0
        %1508 = vmatprep.subr.bf16.mxu0 0
        %1509 = vmatpush1.bf16.xpose.msra.mxu0 0
        %1510 = vmatprep.subr.bf16.mxu0 0
        %1511 = vmatpush1.bf16.xpose.msra.mxu0 0
        %1512 = vmatprep.subr.bf16.mxu0 0
        %1513 = vmatpush1.bf16.xpose.msra.mxu0 0
        %1514 = vmatprep.subr.bf16.mxu0 0
        %1515 = vmatpush1.bf16.xpose.msra.mxu0 0
        %1516 = vmatprep.mubr.bf16.mxu0 0
        %1517 = vmatmul.mubr.bf16.gmra.mrb[0].mxu0 %v1479
        %v1518 = vpop.f32.mrb[0].mxu0
        %v1519 = vadd.f32 0.0, %v1518
        %v1520 = vpop.f32.mrb[0].mxu0
        %v1521 = vpop.f32.mrb[0].mxu0
        %v1522 = vpop.f32.mrb[0].mxu0
        %1523 = vdwg.mxu0
        %v1525 = vsel %vm822, %v1471, 0
        %v1528 = vsel %vm822, %v1057, 0
        %1530 = vmatprep.subr.bf16.mxu0 0
        %1531 = vmatpush1.bf16.xpose.msra.mxu0 %v1528
        %1532 = vmatprep.subr.bf16.mxu0 0
        %1533 = vmatpush1.bf16.xpose.msra.mxu0 0
        %1534 = vmatprep.subr.bf16.mxu0 0
        %1535 = vmatpush1.bf16.xpose.msra.mxu0 0
        %1536 = vmatprep.subr.bf16.mxu0 0
        %1537 = vmatpush1.bf16.xpose.msra.mxu0 0
        %1538 = vmatprep.subr.bf16.mxu0 0
        %1539 = vmatpush1.bf16.xpose.msra.mxu0 0
        %1540 = vmatprep.subr.bf16.mxu0 0
        %1541 = vmatpush1.bf16.xpose.msra.mxu0 0
        %1542 = vmatprep.subr.bf16.mxu0 0
        %1543 = vmatpush1.bf16.xpose.msra.mxu0 0
        %1544 = vmatprep.subr.bf16.mxu0 0
        %1545 = vmatpush1.bf16.xpose.msra.mxu0 0
        %1546 = vmatprep.subr.bf16.mxu0 0
        %1547 = vmatpush1.bf16.xpose.msra.mxu0 0
        %1548 = vmatprep.subr.bf16.mxu0 0
        %1549 = vmatpush1.bf16.xpose.msra.mxu0 0
        %1550 = vmatprep.subr.bf16.mxu0 0
        %1551 = vmatpush1.bf16.xpose.msra.mxu0 0
        %1552 = vmatprep.subr.bf16.mxu0 0
        %1553 = vmatpush1.bf16.xpose.msra.mxu0 0
        %1554 = vmatprep.subr.bf16.mxu0 0
        %1555 = vmatpush1.bf16.xpose.msra.mxu0 0
        %1556 = vmatprep.subr.bf16.mxu0 0
        %1557 = vmatpush1.bf16.xpose.msra.mxu0 0
        %1558 = vmatprep.subr.bf16.mxu0 0
        %1559 = vmatpush1.bf16.xpose.msra.mxu0 0
        %1560 = vmatprep.subr.bf16.mxu0 0
        %1561 = vmatpush1.bf16.xpose.msra.mxu0 0
        %1562 = vmatprep.mubr.bf16.mxu0 0
        %1563 = vmatmul.mubr.bf16.gmra.mrb[0].mxu0 %v1525
        %v1564 = vpop.f32.mrb[0].mxu0
        %v1565 = vadd.f32 0.0, %v1564
        %v1566 = vpop.f32.mrb[0].mxu0
        %v1567 = vpop.f32.mrb[0].mxu0
        %v1568 = vpop.f32.mrb[0].mxu0
        %1569 = vdwg.mxu0
        %v1571 = vsel %vm822, %v1474, 0
        %v1574 = vsel %vm822, %v1058, 0
        %1576 = vmatprep.subr.bf16.mxu0 0
        %1577 = vmatpush1.bf16.xpose.msra.mxu0 %v1574
        %1578 = vmatprep.subr.bf16.mxu0 0
        %1579 = vmatpush1.bf16.xpose.msra.mxu0 0
        %1580 = vmatprep.subr.bf16.mxu0 0
        %1581 = vmatpush1.bf16.xpose.msra.mxu0 0
        %1582 = vmatprep.subr.bf16.mxu0 0
        %1583 = vmatpush1.bf16.xpose.msra.mxu0 0
        %1584 = vmatprep.subr.bf16.mxu0 0
        %1585 = vmatpush1.bf16.xpose.msra.mxu0 0
        %1586 = vmatprep.subr.bf16.mxu0 0
        %1587 = vmatpush1.bf16.xpose.msra.mxu0 0
        %1588 = vmatprep.subr.bf16.mxu0 0
        %1589 = vmatpush1.bf16.xpose.msra.mxu0 0
        %1590 = vmatprep.subr.bf16.mxu0 0
        %1591 = vmatpush1.bf16.xpose.msra.mxu0 0
        %1592 = vmatprep.subr.bf16.mxu0 0
        %1593 = vmatpush1.bf16.xpose.msra.mxu0 0
        %1594 = vmatprep.subr.bf16.mxu0 0
        %1595 = vmatpush1.bf16.xpose.msra.mxu0 0
        %1596 = vmatprep.subr.bf16.mxu0 0
        %1597 = vmatpush1.bf16.xpose.msra.mxu0 0
        %1598 = vmatprep.subr.bf16.mxu0 0
        %1599 = vmatpush1.bf16.xpose.msra.mxu0 0
        %1600 = vmatprep.subr.bf16.mxu0 0
        %1601 = vmatpush1.bf16.xpose.msra.mxu0 0
        %1602 = vmatprep.subr.bf16.mxu0 0
        %1603 = vmatpush1.bf16.xpose.msra.mxu0 0
        %1604 = vmatprep.subr.bf16.mxu0 0
        %1605 = vmatpush1.bf16.xpose.msra.mxu0 0
        %1606 = vmatprep.subr.bf16.mxu0 0
        %1607 = vmatpush1.bf16.xpose.msra.mxu0 0
        %1608 = vmatprep.mubr.bf16.mxu0 0
        %1609 = vmatmul.mubr.bf16.gmra.mrb[0].mxu0 %v1571
        %v1610 = vpop.f32.mrb[0].mxu0
        %v1611 = vadd.f32 0.0, %v1610
        %v1612 = vpop.f32.mrb[0].mxu0
        %v1613 = vpop.f32.mrb[0].mxu0
        %v1614 = vpop.f32.mrb[0].mxu0
        %1615 = vdwg.mxu0
        %v1617 = vsel %vm822, %v1477, 0
        %v1620 = vsel %vm822, %v1059, 0
        %1622 = vmatprep.subr.bf16.mxu0 0
        %1623 = vmatpush1.bf16.xpose.msra.mxu0 %v1620
        %1624 = vmatprep.subr.bf16.mxu0 0
        %1625 = vmatpush1.bf16.xpose.msra.mxu0 0
        %1626 = vmatprep.subr.bf16.mxu0 0
        %1627 = vmatpush1.bf16.xpose.msra.mxu0 0
        %1628 = vmatprep.subr.bf16.mxu0 0
        %1629 = vmatpush1.bf16.xpose.msra.mxu0 0
        %1630 = vmatprep.subr.bf16.mxu0 0
        %1631 = vmatpush1.bf16.xpose.msra.mxu0 0
        %1632 = vmatprep.subr.bf16.mxu0 0
        %1633 = vmatpush1.bf16.xpose.msra.mxu0 0
        %1634 = vmatprep.subr.bf16.mxu0 0
        %1635 = vmatpush1.bf16.xpose.msra.mxu0 0
        %1636 = vmatprep.subr.bf16.mxu0 0
        %1637 = vmatpush1.bf16.xpose.msra.mxu0 0
        %1638 = vmatprep.subr.bf16.mxu0 0
        %1639 = vmatpush1.bf16.xpose.msra.mxu0 0
        %1640 = vmatprep.subr.bf16.mxu0 0
        %1641 = vmatpush1.bf16.xpose.msra.mxu0 0
        %1642 = vmatprep.subr.bf16.mxu0 0
        %1643 = vmatpush1.bf16.xpose.msra.mxu0 0
        %1644 = vmatprep.subr.bf16.mxu0 0
        %1645 = vmatpush1.bf16.xpose.msra.mxu0 0
        %1646 = vmatprep.subr.bf16.mxu0 0
        %1647 = vmatpush1.bf16.xpose.msra.mxu0 0
        %1648 = vmatprep.subr.bf16.mxu0 0
        %1649 = vmatpush1.bf16.xpose.msra.mxu0 0
        %1650 = vmatprep.subr.bf16.mxu0 0
        %1651 = vmatpush1.bf16.xpose.msra.mxu0 0
        %1652 = vmatprep.subr.bf16.mxu0 0
        %1653 = vmatpush1.bf16.xpose.msra.mxu0 0
        %1654 = vmatprep.mubr.bf16.mxu0 0
        %1655 = vmatmul.mubr.bf16.gmra.mrb[0].mxu0 %v1617
        %v1656 = vpop.f32.mrb[0].mxu0
        %v1657 = vadd.f32 0.0, %v1656
        %v1658 = vpop.f32.mrb[0].mxu0
        %v1659 = vpop.f32.mrb[0].mxu0
        %v1660 = vpop.f32.mrb[0].mxu0
        %1661 = vdwg.mxu0
        %1662 = vxpose.xlu0.b32.start [1/16] %v1519, 128
        %1663 = vxpose.xlu0.b32.cont [2/16] 0.0, 128
        %1664 = vxpose.xlu0.b32.cont [3/16] 0.0, 128
        %1665 = vxpose.xlu0.b32.cont [4/16] 0.0, 128
        %1666 = vxpose.xlu0.b32.cont [5/16] 0.0, 128
        %1667 = vxpose.xlu0.b32.cont [6/16] 0.0, 128
        %1668 = vxpose.xlu0.b32.cont [7/16] 0.0, 128
        %1669 = vxpose.xlu0.b32.cont [8/16] 0.0, 128
        %1670 = vxpose.xlu0.b32.cont [9/16] 0.0, 128
        %1671 = vxpose.xlu0.b32.cont [10/16] 0.0, 128
        %1672 = vxpose.xlu0.b32.cont [11/16] 0.0, 128
        %1673 = vxpose.xlu0.b32.cont [12/16] 0.0, 128
        %1674 = vxpose.xlu0.b32.cont [13/16] 0.0, 128
        %1675 = vxpose.xlu0.b32.cont [14/16] 0.0, 128
        %1676 = vxpose.xlu0.b32.cont [15/16] 0.0, 128
        %1677 = vxpose.xlu0.b32.end [16/16] 0.0, 128
        %v1678 = vpop.trf.xlu0
        %v1679 = vpop.trf.xlu0
        %v1680 = vpop.trf.xlu0
        %v1681 = vpop.trf.xlu0
        %v1682 = vpop.trf.xlu0
        %v1683 = vpop.trf.xlu0
        %v1684 = vpop.trf.xlu0
        %v1685 = vpop.trf.xlu0
        %v1686 = vpop.trf.xlu0
        %v1687 = vpop.trf.xlu0
        %v1688 = vpop.trf.xlu0
        %v1689 = vpop.trf.xlu0
        %v1690 = vpop.trf.xlu0
        %v1691 = vpop.trf.xlu0
        %v1692 = vpop.trf.xlu0
        %v1693 = vpop.trf.xlu0
        %1694 = vxpose.xlu0.b32.start [1/16] %v1565, 128
        %1695 = vxpose.xlu0.b32.cont [2/16] 0.0, 128
        %1696 = vxpose.xlu0.b32.cont [3/16] 0.0, 128
        %1697 = vxpose.xlu0.b32.cont [4/16] 0.0, 128
        %1698 = vxpose.xlu0.b32.cont [5/16] 0.0, 128
        %1699 = vxpose.xlu0.b32.cont [6/16] 0.0, 128
        %1700 = vxpose.xlu0.b32.cont [7/16] 0.0, 128
        %1701 = vxpose.xlu0.b32.cont [8/16] 0.0, 128
        %1702 = vxpose.xlu0.b32.cont [9/16] 0.0, 128
        %1703 = vxpose.xlu0.b32.cont [10/16] 0.0, 128
        %1704 = vxpose.xlu0.b32.cont [11/16] 0.0, 128
        %1705 = vxpose.xlu0.b32.cont [12/16] 0.0, 128
        %1706 = vxpose.xlu0.b32.cont [13/16] 0.0, 128
        %1707 = vxpose.xlu0.b32.cont [14/16] 0.0, 128
        %1708 = vxpose.xlu0.b32.cont [15/16] 0.0, 128
        %1709 = vxpose.xlu0.b32.end [16/16] 0.0, 128
        %v1710 = vpop.trf.xlu0
        %v1711 = vpop.trf.xlu0
        %v1712 = vpop.trf.xlu0
        %v1713 = vpop.trf.xlu0
        %v1714 = vpop.trf.xlu0
        %v1715 = vpop.trf.xlu0
        %v1716 = vpop.trf.xlu0
        %v1717 = vpop.trf.xlu0
        %v1718 = vpop.trf.xlu0
        %v1719 = vpop.trf.xlu0
        %v1720 = vpop.trf.xlu0
        %v1721 = vpop.trf.xlu0
        %v1722 = vpop.trf.xlu0
        %v1723 = vpop.trf.xlu0
        %v1724 = vpop.trf.xlu0
        %v1725 = vpop.trf.xlu0
        %1726 = vxpose.xlu0.b32.start [1/16] %v1611, 128
        %1727 = vxpose.xlu0.b32.cont [2/16] 0.0, 128
        %1728 = vxpose.xlu0.b32.cont [3/16] 0.0, 128
        %1729 = vxpose.xlu0.b32.cont [4/16] 0.0, 128
        %1730 = vxpose.xlu0.b32.cont [5/16] 0.0, 128
        %1731 = vxpose.xlu0.b32.cont [6/16] 0.0, 128
        %1732 = vxpose.xlu0.b32.cont [7/16] 0.0, 128
        %1733 = vxpose.xlu0.b32.cont [8/16] 0.0, 128
        %1734 = vxpose.xlu0.b32.cont [9/16] 0.0, 128
        %1735 = vxpose.xlu0.b32.cont [10/16] 0.0, 128
        %1736 = vxpose.xlu0.b32.cont [11/16] 0.0, 128
        %1737 = vxpose.xlu0.b32.cont [12/16] 0.0, 128
        %1738 = vxpose.xlu0.b32.cont [13/16] 0.0, 128
        %1739 = vxpose.xlu0.b32.cont [14/16] 0.0, 128
        %1740 = vxpose.xlu0.b32.cont [15/16] 0.0, 128
        %1741 = vxpose.xlu0.b32.end [16/16] 0.0, 128
        %v1742 = vpop.trf.xlu0
        %v1743 = vpop.trf.xlu0
        %v1744 = vpop.trf.xlu0
        %v1745 = vpop.trf.xlu0
        %v1746 = vpop.trf.xlu0
        %v1747 = vpop.trf.xlu0
        %v1748 = vpop.trf.xlu0
        %v1749 = vpop.trf.xlu0
        %v1750 = vpop.trf.xlu0
        %v1751 = vpop.trf.xlu0
        %v1752 = vpop.trf.xlu0
        %v1753 = vpop.trf.xlu0
        %v1754 = vpop.trf.xlu0
        %v1755 = vpop.trf.xlu0
        %v1756 = vpop.trf.xlu0
        %v1757 = vpop.trf.xlu0
        %1758 = vxpose.xlu0.b32.start [1/16] %v1657, 128
        %1759 = vxpose.xlu0.b32.cont [2/16] 0.0, 128
        %1760 = vxpose.xlu0.b32.cont [3/16] 0.0, 128
        %1761 = vxpose.xlu0.b32.cont [4/16] 0.0, 128
        %1762 = vxpose.xlu0.b32.cont [5/16] 0.0, 128
        %1763 = vxpose.xlu0.b32.cont [6/16] 0.0, 128
        %1764 = vxpose.xlu0.b32.cont [7/16] 0.0, 128
        %1765 = vxpose.xlu0.b32.cont [8/16] 0.0, 128
        %1766 = vxpose.xlu0.b32.cont [9/16] 0.0, 128
        %1767 = vxpose.xlu0.b32.cont [10/16] 0.0, 128
        %1768 = vxpose.xlu0.b32.cont [11/16] 0.0, 128
        %1769 = vxpose.xlu0.b32.cont [12/16] 0.0, 128
        %1770 = vxpose.xlu0.b32.cont [13/16] 0.0, 128
        %1771 = vxpose.xlu0.b32.cont [14/16] 0.0, 128
        %1772 = vxpose.xlu0.b32.cont [15/16] 0.0, 128
        %1773 = vxpose.xlu0.b32.end [16/16] 0.0, 128
        %v1774 = vpop.trf.xlu0
        %v1775 = vpop.trf.xlu0
        %v1776 = vpop.trf.xlu0
        %v1777 = vpop.trf.xlu0
        %v1778 = vpop.trf.xlu0
        %v1779 = vpop.trf.xlu0
        %v1780 = vpop.trf.xlu0
        %v1781 = vpop.trf.xlu0
        %v1782 = vpop.trf.xlu0
        %v1783 = vpop.trf.xlu0
        %v1784 = vpop.trf.xlu0
        %v1785 = vpop.trf.xlu0
        %v1786 = vpop.trf.xlu0
        %v1787 = vpop.trf.xlu0
        %v1788 = vpop.trf.xlu0
        %v1789 = vpop.trf.xlu0
        %v1790 = vcombine.low %v1678, %v1742
        %v1791 = vcombine.high %v1678, %v1742
        %v1793 = vunpack.c.l.s4 1983009808
        %v1794 = vunpack.c.0.s8 %v1793
        %v1795 = vlaneseq
        %v1796 = vshrl.u32 %v1795, 7
        %v1797 = vsub.s32 %v1794, %v1796
        %v1798 = vrot.slane %v1790, %v1797
        %v1800 = vunpack.c.l.s4 1983009808
        %v1801 = vunpack.c.0.s8 %v1800
        %v1802 = vlaneseq
        %v1803 = vshrl.u32 %v1802, 7
        %v1804 = vsub.s32 %v1801, %v1803
        %v1805 = vrot.slane %v1791, %v1804
        %v1806 = vcombine.low %v1710, %v1774
        %v1807 = vcombine.high %v1710, %v1774
        %v1809 = vunpack.c.l.s4 1983009808
        %v1810 = vunpack.c.0.s8 %v1809
        %v1811 = vlaneseq
        %v1812 = vshrl.u32 %v1811, 7
        %v1813 = vsub.s32 %v1810, %v1812
        %v1814 = vrot.slane %v1806, %v1813
        %v1816 = vunpack.c.l.s4 1983009808
        %v1817 = vunpack.c.0.s8 %v1816
        %v1818 = vlaneseq
        %v1819 = vshrl.u32 %v1818, 7
        %v1820 = vsub.s32 %v1817, %v1819
        %v1821 = vrot.slane %v1807, %v1820
        %v1822 = vcombine.low %v1798, %v1814
        %v1823 = vcombine.high %v1798, %v1814
        %v1825 = vunpack.c.l.s4 1934713408
        %v1826 = vunpack.c.0.s8 %v1825
        %v1827 = vlaneseq
        %v1828 = vshrl.u32 %v1827, 7
        %v1829 = vsub.s32 %v1826, %v1828
        %v1830 = vrot.slane %v1822, %v1829
        %v1832 = vunpack.c.l.s4 1934713408
        %v1833 = vunpack.c.0.s8 %v1832
        %v1834 = vlaneseq
        %v1835 = vshrl.u32 %v1834, 7
        %v1836 = vsub.s32 %v1833, %v1835
        %v1837 = vrot.slane %v1823, %v1836
        %v1838 = vcombine.low %v1805, %v1821
        %v1839 = vcombine.high %v1805, %v1821
        %v1841 = vunpack.c.l.s4 1934713408
        %v1842 = vunpack.c.0.s8 %v1841
        %v1843 = vlaneseq
        %v1844 = vshrl.u32 %v1843, 7
        %v1845 = vsub.s32 %v1842, %v1844
        %v1846 = vrot.slane %v1838, %v1845
        %v1848 = vunpack.c.l.s4 1934713408
        %v1849 = vunpack.c.0.s8 %v1848
        %v1850 = vlaneseq
        %v1851 = vshrl.u32 %v1850, 7
        %v1852 = vsub.s32 %v1849, %v1851
        %v1853 = vrot.slane %v1839, %v1852
        %v1854 = vcombine.high %v1830, 0.0
        %v1855 = vcombine.high %v1837, 0.0
        %v1856 = vcombine.high %v1846, 0.0
        %v1857 = vcombine.high %v1853, 0.0
        %v1858 = vcombine.low %v1830, %v1837
        %v1860 = vunpack.c.l.s4 1983009808
        %v1861 = vunpack.c.0.s8 %v1860
        %v1862 = vlaneseq
        %v1863 = vshrl.u32 %v1862, 7
        %v1864 = vsub.s32 %v1861, %v1863
        %v1865 = vrot.slane %v1858, %v1864
        %v1866 = vcombine.low %v1854, %v1855
        %v1868 = vunpack.c.l.s4 1983009808
        %v1869 = vunpack.c.0.s8 %v1868
        %v1870 = vlaneseq
        %v1871 = vshrl.u32 %v1870, 7
        %v1872 = vsub.s32 %v1869, %v1871
        %v1873 = vrot.slane %v1866, %v1872
        %v1874 = vcombine.low %v1846, %v1853
        %v1876 = vunpack.c.l.s4 1983009808
        %v1877 = vunpack.c.0.s8 %v1876
        %v1878 = vlaneseq
        %v1879 = vshrl.u32 %v1878, 7
        %v1880 = vsub.s32 %v1877, %v1879
        %v1881 = vrot.slane %v1874, %v1880
        %v1882 = vcombine.low %v1856, %v1857
        %v1884 = vunpack.c.l.s4 1983009808
        %v1885 = vunpack.c.0.s8 %v1884
        %v1886 = vlaneseq
        %v1887 = vshrl.u32 %v1886, 7
        %v1888 = vsub.s32 %v1885, %v1887
        %v1889 = vrot.slane %v1882, %v1888
        %v1890 = vcombine.low %v1865, %v1873
        %v1891 = vcombine.high %v1865, %v1873
        %v1893 = vunpack.c.l.s4 1934713408
        %v1894 = vunpack.c.0.s8 %v1893
        %v1895 = vlaneseq
        %v1896 = vshrl.u32 %v1895, 7
        %v1897 = vsub.s32 %v1894, %v1896
        %v1898 = vrot.slane %v1890, %v1897
        %v1900 = vunpack.c.l.s4 1934713408
        %v1901 = vunpack.c.0.s8 %v1900
        %v1902 = vlaneseq
        %v1903 = vshrl.u32 %v1902, 7
        %v1904 = vsub.s32 %v1901, %v1903
        %v1905 = vrot.slane %v1891, %v1904
        %v1906 = vcombine.low %v1881, %v1889
        %v1907 = vcombine.high %v1881, %v1889
        %v1909 = vunpack.c.l.s4 1934713408
        %v1910 = vunpack.c.0.s8 %v1909
        %v1911 = vlaneseq
        %v1912 = vshrl.u32 %v1911, 7
        %v1913 = vsub.s32 %v1910, %v1912
        %v1914 = vrot.slane %v1906, %v1913
        %v1916 = vunpack.c.l.s4 1934713408
        %v1917 = vunpack.c.0.s8 %v1916
        %v1918 = vlaneseq
        %v1919 = vshrl.u32 %v1918, 7
        %v1920 = vsub.s32 %v1917, %v1919
        %v1921 = vrot.slane %v1907, %v1920
        %v1922 = vcombine.low %v1898, %v1914
        %v1923 = vcombine.high %v1898, %v1914
        %v1924 = vcombine.low %v1905, %v1921
        %v1925 = vcombine.high %v1905, %v1921
        %1927 = vrot.lane.b32.xlu0 %v1923, 8
        %v1928 = vpop.permute.xlu0 %1927
        %1931 = vrot.lane.b32.xlu0 %v1924, 16
        %v1932 = vpop.permute.xlu0 %1931
        %1935 = vrot.lane.b32.xlu0 %v1925, 24
        %v1936 = vpop.permute.xlu0 %1935
        %v1938 = vsel %vm822, %v1922, %v1928
        %vm1939 = vcmask 130048
        %v1940 = vsel %vm1939, %v1938, %v1932
        %vm1941 = vcmask 195584
        %v1942 = vsel %vm1941, %v1940, %v1936
        %v1943 = vpack.c.bf16 %v1942, %v1942
        %v1944 = vld [vmem:[%s3] sm:$0xf]
        %v1945 = vld [vmem:[%s3 + $0x4] sm:$0xf]
        %v1946 = vld [vmem:[%s3 + $0x8] sm:$0xf]
        %v1947 = vld [vmem:[%s3 + $0xc] sm:$0xf]
        %v1948 = vld [vmem:[%s4] sm:$0x1]
        %v1950 = vlaneseq
        %v1951 = vshrl.u32 %v1950, 7
        %v1952 = vsub.s32 0, %v1951
        %v1953 = vrot.slane %v1948, %v1952
        %v1959 = vunpack.c.l.b16 %v1944
        %v1960 = vunpack.c.l.b16 %v1945
        %v1961 = vunpack.c.l.b16 %v1946
        %v1962 = vunpack.c.l.b16 %v1947
        %v1963 = vpack.c.b16 %v1960, %v1959
        %v1964 = vpack.c.b16 %v1962, %v1961
        %vm1967 = vcmask 261120
        %v1969 = vsel %vm1967, %v1943, 0
        %1971 = vmatprep.subr.bf16.mxu0 0
        %1972 = vmatpush1.bf16.msra.mxu0 %v1963
        %1973 = vmatprep.subr.bf16.mxu0 0
        %1974 = vmatpush1.bf16.msra.mxu0 %v1964
        %1975 = vmatprep.subr.bf16.mxu0 0
        %1976 = vmatpush1.bf16.msra.mxu0 0
        %1977 = vmatprep.subr.bf16.mxu0 0
        %1978 = vmatpush1.bf16.msra.mxu0 0
        %1979 = vmatprep.subr.bf16.mxu0 0
        %1980 = vmatpush1.bf16.msra.mxu0 0
        %1981 = vmatprep.subr.bf16.mxu0 0
        %1982 = vmatpush1.bf16.msra.mxu0 0
        %1983 = vmatprep.subr.bf16.mxu0 0
        %1984 = vmatpush1.bf16.msra.mxu0 0
        %1985 = vmatprep.subr.bf16.mxu0 0
        %1986 = vmatpush1.bf16.msra.mxu0 0
        %1987 = vmatprep.subr.bf16.mxu0 0
        %1988 = vmatpush1.bf16.msra.mxu0 0
        %1989 = vmatprep.subr.bf16.mxu0 0
        %1990 = vmatpush1.bf16.msra.mxu0 0
        %1991 = vmatprep.subr.bf16.mxu0 0
        %1992 = vmatpush1.bf16.msra.mxu0 0
        %1993 = vmatprep.subr.bf16.mxu0 0
        %1994 = vmatpush1.bf16.msra.mxu0 0
        %1995 = vmatprep.subr.bf16.mxu0 0
        %1996 = vmatpush1.bf16.msra.mxu0 0
        %1997 = vmatprep.subr.bf16.mxu0 0
        %1998 = vmatpush1.bf16.msra.mxu0 0
        %1999 = vmatprep.subr.bf16.mxu0 0
        %2000 = vmatpush1.bf16.msra.mxu0 0
        %2001 = vmatprep.subr.bf16.mxu0 0
        %2002 = vmatpush1.bf16.msra.mxu0 0
        %2003 = vmatprep.mubr.bf16.mxu0 0
        %2004 = vmatmul.mubr.bf16.gmra.mrb[0].mxu0 %v1969
        %v2005 = vpop.f32.mrb[0].mxu0
        %v2006 = vadd.f32 %v1953, %v2005
        %v2007 = vpop.f32.mrb[0].mxu0
        %v2008 = vpop.f32.mrb[0].mxu0
        %v2009 = vpop.f32.mrb[0].mxu0
        %2010 = vdwg.mxu0
        %2011 = vst.msk [vmem:[%s272] sm:$0xff] %vm1967, %v2006
        %s2012 = sand.u32 %s163, 1
        %s2013 = scalar_lea.sflag [#allocation3], %s2012
        %s2014 = sand.u32 %s163, 1
        %s2015 = smul.addr %s2014, 8
        %s2016 = scalar_lea.vmem [#allocation2], %s2015
        // Predicated region
        $region41: #{multi_head_attention.7} parent=39 // pred_check
          %p2017 = pneg %p173
        $region42: #{multi_head_attention.7} parent=39 // pred_check_branch
          %2019 = sbr.rel (%p2017) target = $region44
        $region43: #{multi_head_attention.7} parent=39 // pred_region
          %s2021 = ssub.s32 128, 128
          %2022 = vsyncadd %s2013, %s2021
          %s2023 = sadd.s32 %s24, %s23
          %s2024 = smul.addr %s2023, 128
          %s2025 = scalar_lea.hbm %s5, %s2024
          %s2027 = sshll.u32 %s2016, 4
          %s2028 = int_to_ptr.vmem [resolvable:$true] %s2027
          %2030 = dma.vmem_to_hbm [thread:$0]  %s2028, 128, %s2025, %s2013
        $region44: #{multi_head_attention.7} parent=39 // pred_fallthru
          _
      $region40: #{multi_head_attention.7} parent=5 // pred_fallthru
        _
      %p2031 = scmp.le.s32.totalorder 2, %s14
      // Predicated region
      $region45: #{multi_head_attention.7} parent=5 // pred_check
        %p2032 = pneg %p2031
      $region46: #{multi_head_attention.7} parent=5 // pred_check_branch
        %2034 = sbr.rel (%p2032) target = $region48
      $region47: #{multi_head_attention.7} parent=5 // pred_region
        %s2035 = ssub.s32 %s14, 2
        // Predicated region
        $region49: #{multi_head_attention.7} parent=47 // pred_check
          %p2036 = pneg %p179
        $region50: #{multi_head_attention.7} parent=47 // pred_check_branch
          %2038 = sbr.rel (%p2036) target = $region52
        $region51: #{multi_head_attention.7} parent=47 // pred_region
          %s2039 = sand.u32 %s164, 1
          %s2040 = scalar_lea.sflag [#allocation3], %s2039
          %s2041 = sand.u32 %s164, 1
          %s2042 = smul.addr %s2041, 8
          %s2043 = scalar_lea.vmem [#allocation2], %s2042
          %2044 = dma.done %s2040, 128
        $region52: #{multi_head_attention.7} parent=47 // pred_fallthru
          _
      $region48: #{multi_head_attention.7} parent=5 // pred_fallthru
        _
    $region6: #{multi_head_attention.7} parent=1 // loop_footer
      %s18 = sadd.s32 1, %s14
    $region7: #{multi_head_attention.7} parent=1 // loop_footer_branch
      %13 = sbr.rel target = $region3
    $region8: #{multi_head_attention.7} parent=1 // loop_exit
      _
    %2045 = vsyncpa [#allocation3], 1
    %s2046 = scalar_lea.sflag [#allocation3], 1
    %2047 = vsyncpa %s2046, 1

</llo_original>
